<compile_context>
chip_gen: v7x
topology: tpu7x:2x2x1
jax: 0.10.0
libtpu: 0.0.40
codegen_flags: <defaults>
</compile_context>

<pallas_src>
import functools

import jax
import jax.numpy as jnp
from jax import lax
from jax.experimental import pallas as pl
from jax.experimental.pallas import tpu as pltpu


def upsample_concat_kernel(w_ref, b_ref, dup_ref, x_ref, f_ref, o_ref):
    """One (batch, row-tile) grid step.

    w_ref  : (C_half, C_in)            resident 1x1-conv weight
    b_ref  : (C_half, 1)               resident bias
    dup_ref: (W, 2W)                   resident 0/1 column-duplication matrix
    x_ref  : (1, C_in,   T_H,   W)     input rows  [i*T_H, (i+1)*T_H)
    f_ref  : (1, C_f,  2*T_H, 2*W)     skip-connection rows (already full-res)
    o_ref  : (1, C_half + C_f, 2*T_H, 2*W)
    """
    c_half = w_ref.shape[0]
    t_h = x_ref.shape[2]

    # Fused torch.cat: skip-connection passthrough into the upper channels (dense copy).
    o_ref[0, c_half:, :, :] = f_ref[0]

    wmat = w_ref[...]
    bias = b_ref[...]
    dup = dup_ref[...]
    for i in range(t_h):  # static unroll; t_h is small (<= 32)
        xrow = x_ref[0, :, i, :]                                            # (C_in, W)
        # 1x1 conv at input resolution: (C_half, C_in) @ (C_in, W) on the MXU, + bias.
        yrow = jnp.dot(wmat, xrow, preferred_element_type=jnp.float32) + bias
        # Nearest-neighbour column duplication (W -> 2W) via the idle MXU.
        ydup = jnp.dot(yrow, dup, preferred_element_type=jnp.float32)       # (C_half, 2W)
        # Nearest-neighbour row duplication: same row goes to output rows 2i and 2i+1.
        o_ref[0, 0:c_half, 2 * i, :] = ydup
        o_ref[0, 0:c_half, 2 * i + 1, :] = ydup


def _pick_tile_h(h, c_in, c_half, c_f, w, budget_bytes=8 * 1024 * 1024):
    """Largest row tile (multiple of 8, dividing h) whose double-buffered blocks
    fit a conservative VMEM budget (safe on v7x's 64 MiB VMEM as well)."""
    if h % 8 != 0:
        return h  # tiny / odd heights: single tile over the full height
    best = 8
    t = 8
    while 2 * t <= h and h % (2 * t) == 0:
        t *= 2
        blk_bytes = 4 * (c_in * t * w + (c_f + c_half + c_f) * (2 * t) * (2 * w))
        if 2 * blk_bytes > budget_bytes:  # x2 for double buffering
            break
        best = t
    return best


@functools.partial(jax.jit, static_argnames=("tile_h",))
def upsample_forward(x, feature_map, weight, bias, *, tile_h=None):
    """x: (N, C, H, W); feature_map: (N, Cf, 2H, 2W); weight: (C//2, C, 1, 1); bias: (C//2,)."""
    n, c_in, h, w = x.shape
    c_half = weight.shape[0]
    nf, c_f, hf, wf = feature_map.shape
    assert nf == n and hf == 2 * h and wf == 2 * w, "feature_map must be (N, Cf, 2H, 2W)"
    c_total = c_half + c_f

    w2d = weight.reshape(c_half, c_in).astype(jnp.float32)  # 1x1 conv == channel matmul
    b2d = bias.reshape(c_half, 1).astype(jnp.float32)
    # 0/1 column-duplication matrix: dup[j, 2j] = dup[j, 2j+1] = 1.
    dup = (jnp.arange(2 * w)[None, :] // 2 == jnp.arange(w)[:, None]).astype(jnp.float32)

    if tile_h is None:
        tile_h = _pick_tile_h(h, c_in, c_half, c_f, w)
    assert h % tile_h == 0

    grid = (n, h // tile_h)
    out = pl.pallas_call(
        upsample_concat_kernel,
        out_shape=jax.ShapeDtypeStruct((n, c_total, 2 * h, 2 * w), jnp.float32),
        grid=grid,
        in_specs=[
            pl.BlockSpec((c_half, c_in), lambda b, i: (0, 0)),              # resident weight
            pl.BlockSpec((c_half, 1), lambda b, i: (0, 0)),                 # resident bias
            pl.BlockSpec((w, 2 * w), lambda b, i: (0, 0)),                  # resident dup matrix
            pl.BlockSpec((1, c_in, tile_h, w), lambda b, i: (b, 0, i, 0)),  # input row tile
            pl.BlockSpec((1, c_f, 2 * tile_h, 2 * w), lambda b, i: (b, 0, i, 0)),  # skip tile
        ],
        out_specs=pl.BlockSpec((1, c_total, 2 * tile_h, 2 * w), lambda b, i: (b, 0, i, 0)),
        compiler_params=pltpu.CompilerParams(
            dimension_semantics=("parallel", "parallel"),
            vmem_limit_bytes=32 * 1024 * 1024,
        ),
    )(w2d, b2d, dup, x.astype(jnp.float32), feature_map.astype(jnp.float32))
    return out


def _reference(x, feature_map, weight, bias):
    """Pure-JAX reference: nearest 2x upsample -> 1x1 conv (+bias) -> channel concat."""
    c_half = weight.shape[0]
    up = jnp.repeat(jnp.repeat(x, 2, axis=2), 2, axis=3)
    w2d = weight.reshape(c_half, weight.shape[1])
    y = jnp.einsum("oc,nchw->nohw", w2d, up, precision=lax.Precision.HIGHEST)
    y = y + bias.reshape(1, c_half, 1, 1)
    return jnp.concatenate([y, feature_map], axis=1)


if __name__ == "__main__":
    key = jax.random.PRNGKey(0)
    k_x, k_f, k_w, k_b = jax.random.split(key, 4)

    N, C, H, W = 2, 4, 16, 16          # channel=4 -> conv 4->2, output (2, 4, 32, 32)
    C_half = C // 2

    # Values on a coarse grid (integers / quarter-multiples) so the comparison is
    # exact under any MXU precision mode.
    x = jnp.round(1.5 * jax.random.normal(k_x, (N, C, H, W))).astype(jnp.float32)
    feature_map = jnp.round(
        1.5 * jax.random.normal(k_f, (N, C_half, 2 * H, 2 * W))).astype(jnp.float32)
    weight = (jnp.round(4.0 * jax.random.normal(k_w, (C_half, C, 1, 1))) / 4.0).astype(jnp.float32)
    bias = (jnp.round(4.0 * jax.random.normal(k_b, (C_half,))) / 4.0).astype(jnp.float32)

    out = upsample_forward(x, feature_map, weight, bias, tile_h=8)
    out = jax.block_until_ready(out)

    ref = _reference(x, feature_map, weight, bias)
    assert out.shape == (N, C_half + C_half, 2 * H, 2 * W)
    assert jnp.allclose(out, ref, rtol=1e-5, atol=1e-5), "mismatch vs reference"

    print("KERNEL_OK")
</pallas_src>

<mosaic_0001>
module attributes {stable_mosaic.version = 11 : i64} {
  func.func @upsample_concat_kernel(%arg0: i32, %arg1: i32, %arg2: memref<2x4xf32, #tpu.memory_space<vmem>>, %arg3: memref<2x1xf32, #tpu.memory_space<vmem>>, %arg4: memref<16x32xf32, #tpu.memory_space<vmem>>, %arg5: memref<1x4x8x16xf32, #tpu.memory_space<vmem>>, %arg6: memref<1x2x16x32xf32, #tpu.memory_space<vmem>>, %arg7: memref<1x4x16x32xf32, #tpu.memory_space<vmem>>) attributes {dimension_semantics = [#tpu.dimension_semantics<parallel>, #tpu.dimension_semantics<parallel>], iteration_bounds = array<i64: 2, 2>, scalar_prefetch = 0 : i64, scratch_operands = 0 : i64, tpu.core_type = #tpu.core_type<tc>, window_params = [{pipeline_mode = #tpu.pipeline_mode<synchronous>, transform_indices = @transform_0, window_bounds = array<i64: 2, 4>}, {pipeline_mode = #tpu.pipeline_mode<synchronous>, transform_indices = @transform_1, window_bounds = array<i64: 2, 1>}, {pipeline_mode = #tpu.pipeline_mode<synchronous>, transform_indices = @transform_2, window_bounds = array<i64: 16, 32>}, {transform_indices = @transform_3, window_bounds = array<i64: 1, 4, 8, 16>}, {transform_indices = @transform_4, window_bounds = array<i64: 1, 2, 16, 32>}, {transform_indices = @transform_5, window_bounds = array<i64: 1, 4, 16, 32>}]} {
    %c0 = arith.constant 0 : index
    %c0_0 = arith.constant 0 : index
    %c0_1 = arith.constant 0 : index
    %c0_2 = arith.constant 0 : index
    %0 = vector.load %arg6[%c0, %c0_0, %c0_1, %c0_2] : memref<1x2x16x32xf32, #tpu.memory_space<vmem>>, vector<1x2x16x32xf32>
    %1 = vector.shape_cast %0 : vector<1x2x16x32xf32> to vector<2x16x32xf32>
    %c0_3 = arith.constant 0 : index
    %c2 = arith.constant 2 : index
    %c0_4 = arith.constant 0 : index
    %c0_5 = arith.constant 0 : index
    %2 = vector.load %arg7[%c0_3, %c2, %c0_4, %c0_5] : memref<1x4x16x32xf32, #tpu.memory_space<vmem>>, vector<1x2x16x32xf32>
    %3 = vector.shape_cast %2 : vector<1x2x16x32xf32> to vector<2x16x32xf32>
    %4 = vector.shape_cast %1 : vector<2x16x32xf32> to vector<1x2x16x32xf32>
    tpu.vector_store %arg7[%c0_3, %c2, %c0_4, %c0_5], %4 {strides = array<i32>} : memref<1x4x16x32xf32, #tpu.memory_space<vmem>>, vector<1x2x16x32xf32>,
    %c0_6 = arith.constant 0 : index
    %c0_7 = arith.constant 0 : index
    %5 = vector.load %arg2[%c0_6, %c0_7] : memref<2x4xf32, #tpu.memory_space<vmem>>, vector<2x4xf32>
    %c0_8 = arith.constant 0 : index
    %c0_9 = arith.constant 0 : index
    %6 = vector.load %arg3[%c0_8, %c0_9] : memref<2x1xf32, #tpu.memory_space<vmem>>, vector<2x1xf32>
    %c0_10 = arith.constant 0 : index
    %c0_11 = arith.constant 0 : index
    %7 = vector.load %arg4[%c0_10, %c0_11] : memref<16x32xf32, #tpu.memory_space<vmem>>, vector<16x32xf32>
    %c0_12 = arith.constant 0 : index
    %c0_13 = arith.constant 0 : index
    %c0_14 = arith.constant 0 : index
    %c0_15 = arith.constant 0 : index
    %8 = vector.load %arg5[%c0_12, %c0_13, %c0_14, %c0_15] : memref<1x4x8x16xf32, #tpu.memory_space<vmem>>, vector<1x4x1x16xf32>
    %9 = vector.shape_cast %8 : vector<1x4x1x16xf32> to vector<4x16xf32>
    %cst = arith.constant dense<0.000000e+00> : vector<2x16xf32>
    %10 = tpu.matmul %5, %9, %cst {dimension_numbers = #tpu.dot_dimension_numbers<[1], [0], [0], [1], [0, 0, 1, 1], [], []>} : vector<2x4xf32>, vector<4x16xf32>, vector<2x16xf32> -> vector<2x16xf32>
    %11 = vector.broadcast %6 : vector<2x1xf32> to vector<2x16xf32>
    %12 = arith.addf %10, %11 : vector<2x16xf32>
    %cst_16 = arith.constant dense<0.000000e+00> : vector<2x32xf32>
    %13 = tpu.matmul %12, %7, %cst_16 {dimension_numbers = #tpu.dot_dimension_numbers<[1], [0], [0], [1], [0, 0, 1, 1], [], []>} : vector<2x16xf32>, vector<16x32xf32>, vector<2x32xf32> -> vector<2x32xf32>
    %c0_17 = arith.constant 0 : index
    %c0_18 = arith.constant 0 : index
    %c0_19 = arith.constant 0 : index
    %c0_20 = arith.constant 0 : index
    %14 = vector.load %arg7[%c0_17, %c0_18, %c0_19, %c0_20] : memref<1x4x16x32xf32, #tpu.memory_space<vmem>>, vector<1x2x1x32xf32>
    %15 = vector.shape_cast %14 : vector<1x2x1x32xf32> to vector<2x32xf32>
    %16 = vector.shape_cast %13 : vector<2x32xf32> to vector<1x2x1x32xf32>
    tpu.vector_store %arg7[%c0_17, %c0_18, %c0_19, %c0_20], %16 {strides = array<i32>} : memref<1x4x16x32xf32, #tpu.memory_space<vmem>>, vector<1x2x1x32xf32>,
    %c0_21 = arith.constant 0 : index
    %c0_22 = arith.constant 0 : index
    %c1 = arith.constant 1 : index
    %c0_23 = arith.constant 0 : index
    %17 = vector.load %arg7[%c0_21, %c0_22, %c1, %c0_23] : memref<1x4x16x32xf32, #tpu.memory_space<vmem>>, vector<1x2x1x32xf32>
    %18 = vector.shape_cast %17 : vector<1x2x1x32xf32> to vector<2x32xf32>
    %19 = vector.shape_cast %13 : vector<2x32xf32> to vector<1x2x1x32xf32>
    tpu.vector_store %arg7[%c0_21, %c0_22, %c1, %c0_23], %19 {strides = array<i32>} : memref<1x4x16x32xf32, #tpu.memory_space<vmem>>, vector<1x2x1x32xf32>,
    %c0_24 = arith.constant 0 : index
    %c0_25 = arith.constant 0 : index
    %c1_26 = arith.constant 1 : index
    %c0_27 = arith.constant 0 : index
    %20 = vector.load %arg5[%c0_24, %c0_25, %c1_26, %c0_27] : memref<1x4x8x16xf32, #tpu.memory_space<vmem>>, vector<1x4x1x16xf32>
    %21 = vector.shape_cast %20 : vector<1x4x1x16xf32> to vector<4x16xf32>
    %cst_28 = arith.constant dense<0.000000e+00> : vector<2x16xf32>
    %22 = tpu.matmul %5, %21, %cst_28 {dimension_numbers = #tpu.dot_dimension_numbers<[1], [0], [0], [1], [0, 0, 1, 1], [], []>} : vector<2x4xf32>, vector<4x16xf32>, vector<2x16xf32> -> vector<2x16xf32>
    %23 = vector.broadcast %6 : vector<2x1xf32> to vector<2x16xf32>
    %24 = arith.addf %22, %23 : vector<2x16xf32>
    %cst_29 = arith.constant dense<0.000000e+00> : vector<2x32xf32>
    %25 = tpu.matmul %24, %7, %cst_29 {dimension_numbers = #tpu.dot_dimension_numbers<[1], [0], [0], [1], [0, 0, 1, 1], [], []>} : vector<2x16xf32>, vector<16x32xf32>, vector<2x32xf32> -> vector<2x32xf32>
    %c0_30 = arith.constant 0 : index
    %c0_31 = arith.constant 0 : index
    %c2_32 = arith.constant 2 : index
    %c0_33 = arith.constant 0 : index
    %26 = vector.load %arg7[%c0_30, %c0_31, %c2_32, %c0_33] : memref<1x4x16x32xf32, #tpu.memory_space<vmem>>, vector<1x2x1x32xf32>
    %27 = vector.shape_cast %26 : vector<1x2x1x32xf32> to vector<2x32xf32>
    %28 = vector.shape_cast %25 : vector<2x32xf32> to vector<1x2x1x32xf32>
    tpu.vector_store %arg7[%c0_30, %c0_31, %c2_32, %c0_33], %28 {strides = array<i32>} : memref<1x4x16x32xf32, #tpu.memory_space<vmem>>, vector<1x2x1x32xf32>,
    %c0_34 = arith.constant 0 : index
    %c0_35 = arith.constant 0 : index
    %c3 = arith.constant 3 : index
    %c0_36 = arith.constant 0 : index
    %29 = vector.load %arg7[%c0_34, %c0_35, %c3, %c0_36] : memref<1x4x16x32xf32, #tpu.memory_space<vmem>>, vector<1x2x1x32xf32>
    %30 = vector.shape_cast %29 : vector<1x2x1x32xf32> to vector<2x32xf32>
    %31 = vector.shape_cast %25 : vector<2x32xf32> to vector<1x2x1x32xf32>
    tpu.vector_store %arg7[%c0_34, %c0_35, %c3, %c0_36], %31 {strides = array<i32>} : memref<1x4x16x32xf32, #tpu.memory_space<vmem>>, vector<1x2x1x32xf32>,
    %c0_37 = arith.constant 0 : index
    %c0_38 = arith.constant 0 : index
    %c2_39 = arith.constant 2 : index
    %c0_40 = arith.constant 0 : index
    %32 = vector.load %arg5[%c0_37, %c0_38, %c2_39, %c0_40] : memref<1x4x8x16xf32, #tpu.memory_space<vmem>>, vector<1x4x1x16xf32>
    %33 = vector.shape_cast %32 : vector<1x4x1x16xf32> to vector<4x16xf32>
    %cst_41 = arith.constant dense<0.000000e+00> : vector<2x16xf32>
    %34 = tpu.matmul %5, %33, %cst_41 {dimension_numbers = #tpu.dot_dimension_numbers<[1], [0], [0], [1], [0, 0, 1, 1], [], []>} : vector<2x4xf32>, vector<4x16xf32>, vector<2x16xf32> -> vector<2x16xf32>
    %35 = vector.broadcast %6 : vector<2x1xf32> to vector<2x16xf32>
    %36 = arith.addf %34, %35 : vector<2x16xf32>
    %cst_42 = arith.constant dense<0.000000e+00> : vector<2x32xf32>
    %37 = tpu.matmul %36, %7, %cst_42 {dimension_numbers = #tpu.dot_dimension_numbers<[1], [0], [0], [1], [0, 0, 1, 1], [], []>} : vector<2x16xf32>, vector<16x32xf32>, vector<2x32xf32> -> vector<2x32xf32>
    %c0_43 = arith.constant 0 : index
    %c0_44 = arith.constant 0 : index
    %c4 = arith.constant 4 : index
    %c0_45 = arith.constant 0 : index
    %38 = vector.load %arg7[%c0_43, %c0_44, %c4, %c0_45] : memref<1x4x16x32xf32, #tpu.memory_space<vmem>>, vector<1x2x1x32xf32>
    %39 = vector.shape_cast %38 : vector<1x2x1x32xf32> to vector<2x32xf32>
    %40 = vector.shape_cast %37 : vector<2x32xf32> to vector<1x2x1x32xf32>
    tpu.vector_store %arg7[%c0_43, %c0_44, %c4, %c0_45], %40 {strides = array<i32>} : memref<1x4x16x32xf32, #tpu.memory_space<vmem>>, vector<1x2x1x32xf32>,
    %c0_46 = arith.constant 0 : index
    %c0_47 = arith.constant 0 : index
    %c5 = arith.constant 5 : index
    %c0_48 = arith.constant 0 : index
    %41 = vector.load %arg7[%c0_46, %c0_47, %c5, %c0_48] : memref<1x4x16x32xf32, #tpu.memory_space<vmem>>, vector<1x2x1x32xf32>
    %42 = vector.shape_cast %41 : vector<1x2x1x32xf32> to vector<2x32xf32>
    %43 = vector.shape_cast %37 : vector<2x32xf32> to vector<1x2x1x32xf32>
    tpu.vector_store %arg7[%c0_46, %c0_47, %c5, %c0_48], %43 {strides = array<i32>} : memref<1x4x16x32xf32, #tpu.memory_space<vmem>>, vector<1x2x1x32xf32>,
    %c0_49 = arith.constant 0 : index
    %c0_50 = arith.constant 0 : index
    %c3_51 = arith.constant 3 : index
    %c0_52 = arith.constant 0 : index
    %44 = vector.load %arg5[%c0_49, %c0_50, %c3_51, %c0_52] : memref<1x4x8x16xf32, #tpu.memory_space<vmem>>, vector<1x4x1x16xf32>
    %45 = vector.shape_cast %44 : vector<1x4x1x16xf32> to vector<4x16xf32>
    %cst_53 = arith.constant dense<0.000000e+00> : vector<2x16xf32>
    %46 = tpu.matmul %5, %45, %cst_53 {dimension_numbers = #tpu.dot_dimension_numbers<[1], [0], [0], [1], [0, 0, 1, 1], [], []>} : vector<2x4xf32>, vector<4x16xf32>, vector<2x16xf32> -> vector<2x16xf32>
    %47 = vector.broadcast %6 : vector<2x1xf32> to vector<2x16xf32>
    %48 = arith.addf %46, %47 : vector<2x16xf32>
    %cst_54 = arith.constant dense<0.000000e+00> : vector<2x32xf32>
    %49 = tpu.matmul %48, %7, %cst_54 {dimension_numbers = #tpu.dot_dimension_numbers<[1], [0], [0], [1], [0, 0, 1, 1], [], []>} : vector<2x16xf32>, vector<16x32xf32>, vector<2x32xf32> -> vector<2x32xf32>
    %c0_55 = arith.constant 0 : index
    %c0_56 = arith.constant 0 : index
    %c6 = arith.constant 6 : index
    %c0_57 = arith.constant 0 : index
    %50 = vector.load %arg7[%c0_55, %c0_56, %c6, %c0_57] : memref<1x4x16x32xf32, #tpu.memory_space<vmem>>, vector<1x2x1x32xf32>
    %51 = vector.shape_cast %50 : vector<1x2x1x32xf32> to vector<2x32xf32>
    %52 = vector.shape_cast %49 : vector<2x32xf32> to vector<1x2x1x32xf32>
    tpu.vector_store %arg7[%c0_55, %c0_56, %c6, %c0_57], %52 {strides = array<i32>} : memref<1x4x16x32xf32, #tpu.memory_space<vmem>>, vector<1x2x1x32xf32>,
    %c0_58 = arith.constant 0 : index
    %c0_59 = arith.constant 0 : index
    %c7 = arith.constant 7 : index
    %c0_60 = arith.constant 0 : index
    %53 = vector.load %arg7[%c0_58, %c0_59, %c7, %c0_60] : memref<1x4x16x32xf32, #tpu.memory_space<vmem>>, vector<1x2x1x32xf32>
    %54 = vector.shape_cast %53 : vector<1x2x1x32xf32> to vector<2x32xf32>
    %55 = vector.shape_cast %49 : vector<2x32xf32> to vector<1x2x1x32xf32>
    tpu.vector_store %arg7[%c0_58, %c0_59, %c7, %c0_60], %55 {strides = array<i32>} : memref<1x4x16x32xf32, #tpu.memory_space<vmem>>, vector<1x2x1x32xf32>,
    %c0_61 = arith.constant 0 : index
    %c0_62 = arith.constant 0 : index
    %c4_63 = arith.constant 4 : index
    %c0_64 = arith.constant 0 : index
    %56 = vector.load %arg5[%c0_61, %c0_62, %c4_63, %c0_64] : memref<1x4x8x16xf32, #tpu.memory_space<vmem>>, vector<1x4x1x16xf32>
    %57 = vector.shape_cast %56 : vector<1x4x1x16xf32> to vector<4x16xf32>
    %cst_65 = arith.constant dense<0.000000e+00> : vector<2x16xf32>
    %58 = tpu.matmul %5, %57, %cst_65 {dimension_numbers = #tpu.dot_dimension_numbers<[1], [0], [0], [1], [0, 0, 1, 1], [], []>} : vector<2x4xf32>, vector<4x16xf32>, vector<2x16xf32> -> vector<2x16xf32>
    %59 = vector.broadcast %6 : vector<2x1xf32> to vector<2x16xf32>
    %60 = arith.addf %58, %59 : vector<2x16xf32>
    %cst_66 = arith.constant dense<0.000000e+00> : vector<2x32xf32>
    %61 = tpu.matmul %60, %7, %cst_66 {dimension_numbers = #tpu.dot_dimension_numbers<[1], [0], [0], [1], [0, 0, 1, 1], [], []>} : vector<2x16xf32>, vector<16x32xf32>, vector<2x32xf32> -> vector<2x32xf32>
    %c0_67 = arith.constant 0 : index
    %c0_68 = arith.constant 0 : index
    %c8 = arith.constant 8 : index
    %c0_69 = arith.constant 0 : index
    %62 = vector.load %arg7[%c0_67, %c0_68, %c8, %c0_69] : memref<1x4x16x32xf32, #tpu.memory_space<vmem>>, vector<1x2x1x32xf32>
    %63 = vector.shape_cast %62 : vector<1x2x1x32xf32> to vector<2x32xf32>
    %64 = vector.shape_cast %61 : vector<2x32xf32> to vector<1x2x1x32xf32>
    tpu.vector_store %arg7[%c0_67, %c0_68, %c8, %c0_69], %64 {strides = array<i32>} : memref<1x4x16x32xf32, #tpu.memory_space<vmem>>, vector<1x2x1x32xf32>,
    %c0_70 = arith.constant 0 : index
    %c0_71 = arith.constant 0 : index
    %c9 = arith.constant 9 : index
    %c0_72 = arith.constant 0 : index
    %65 = vector.load %arg7[%c0_70, %c0_71, %c9, %c0_72] : memref<1x4x16x32xf32, #tpu.memory_space<vmem>>, vector<1x2x1x32xf32>
    %66 = vector.shape_cast %65 : vector<1x2x1x32xf32> to vector<2x32xf32>
    %67 = vector.shape_cast %61 : vector<2x32xf32> to vector<1x2x1x32xf32>
    tpu.vector_store %arg7[%c0_70, %c0_71, %c9, %c0_72], %67 {strides = array<i32>} : memref<1x4x16x32xf32, #tpu.memory_space<vmem>>, vector<1x2x1x32xf32>,
    %c0_73 = arith.constant 0 : index
    %c0_74 = arith.constant 0 : index
    %c5_75 = arith.constant 5 : index
    %c0_76 = arith.constant 0 : index
    %68 = vector.load %arg5[%c0_73, %c0_74, %c5_75, %c0_76] : memref<1x4x8x16xf32, #tpu.memory_space<vmem>>, vector<1x4x1x16xf32>
    %69 = vector.shape_cast %68 : vector<1x4x1x16xf32> to vector<4x16xf32>
    %cst_77 = arith.constant dense<0.000000e+00> : vector<2x16xf32>
    %70 = tpu.matmul %5, %69, %cst_77 {dimension_numbers = #tpu.dot_dimension_numbers<[1], [0], [0], [1], [0, 0, 1, 1], [], []>} : vector<2x4xf32>, vector<4x16xf32>, vector<2x16xf32> -> vector<2x16xf32>
    %71 = vector.broadcast %6 : vector<2x1xf32> to vector<2x16xf32>
    %72 = arith.addf %70, %71 : vector<2x16xf32>
    %cst_78 = arith.constant dense<0.000000e+00> : vector<2x32xf32>
    %73 = tpu.matmul %72, %7, %cst_78 {dimension_numbers = #tpu.dot_dimension_numbers<[1], [0], [0], [1], [0, 0, 1, 1], [], []>} : vector<2x16xf32>, vector<16x32xf32>, vector<2x32xf32> -> vector<2x32xf32>
    %c0_79 = arith.constant 0 : index
    %c0_80 = arith.constant 0 : index
    %c10 = arith.constant 10 : index
    %c0_81 = arith.constant 0 : index
    %74 = vector.load %arg7[%c0_79, %c0_80, %c10, %c0_81] : memref<1x4x16x32xf32, #tpu.memory_space<vmem>>, vector<1x2x1x32xf32>
    %75 = vector.shape_cast %74 : vector<1x2x1x32xf32> to vector<2x32xf32>
    %76 = vector.shape_cast %73 : vector<2x32xf32> to vector<1x2x1x32xf32>
    tpu.vector_store %arg7[%c0_79, %c0_80, %c10, %c0_81], %76 {strides = array<i32>} : memref<1x4x16x32xf32, #tpu.memory_space<vmem>>, vector<1x2x1x32xf32>,
    %c0_82 = arith.constant 0 : index
    %c0_83 = arith.constant 0 : index
    %c11 = arith.constant 11 : index
    %c0_84 = arith.constant 0 : index
    %77 = vector.load %arg7[%c0_82, %c0_83, %c11, %c0_84] : memref<1x4x16x32xf32, #tpu.memory_space<vmem>>, vector<1x2x1x32xf32>
    %78 = vector.shape_cast %77 : vector<1x2x1x32xf32> to vector<2x32xf32>
    %79 = vector.shape_cast %73 : vector<2x32xf32> to vector<1x2x1x32xf32>
    tpu.vector_store %arg7[%c0_82, %c0_83, %c11, %c0_84], %79 {strides = array<i32>} : memref<1x4x16x32xf32, #tpu.memory_space<vmem>>, vector<1x2x1x32xf32>,
    %c0_85 = arith.constant 0 : index
    %c0_86 = arith.constant 0 : index
    %c6_87 = arith.constant 6 : index
    %c0_88 = arith.constant 0 : index
    %80 = vector.load %arg5[%c0_85, %c0_86, %c6_87, %c0_88] : memref<1x4x8x16xf32, #tpu.memory_space<vmem>>, vector<1x4x1x16xf32>
    %81 = vector.shape_cast %80 : vector<1x4x1x16xf32> to vector<4x16xf32>
    %cst_89 = arith.constant dense<0.000000e+00> : vector<2x16xf32>
    %82 = tpu.matmul %5, %81, %cst_89 {dimension_numbers = #tpu.dot_dimension_numbers<[1], [0], [0], [1], [0, 0, 1, 1], [], []>} : vector<2x4xf32>, vector<4x16xf32>, vector<2x16xf32> -> vector<2x16xf32>
    %83 = vector.broadcast %6 : vector<2x1xf32> to vector<2x16xf32>
    %84 = arith.addf %82, %83 : vector<2x16xf32>
    %cst_90 = arith.constant dense<0.000000e+00> : vector<2x32xf32>
    %85 = tpu.matmul %84, %7, %cst_90 {dimension_numbers = #tpu.dot_dimension_numbers<[1], [0], [0], [1], [0, 0, 1, 1], [], []>} : vector<2x16xf32>, vector<16x32xf32>, vector<2x32xf32> -> vector<2x32xf32>
    %c0_91 = arith.constant 0 : index
    %c0_92 = arith.constant 0 : index
    %c12 = arith.constant 12 : index
    %c0_93 = arith.constant 0 : index
    %86 = vector.load %arg7[%c0_91, %c0_92, %c12, %c0_93] : memref<1x4x16x32xf32, #tpu.memory_space<vmem>>, vector<1x2x1x32xf32>
    %87 = vector.shape_cast %86 : vector<1x2x1x32xf32> to vector<2x32xf32>
    %88 = vector.shape_cast %85 : vector<2x32xf32> to vector<1x2x1x32xf32>
    tpu.vector_store %arg7[%c0_91, %c0_92, %c12, %c0_93], %88 {strides = array<i32>} : memref<1x4x16x32xf32, #tpu.memory_space<vmem>>, vector<1x2x1x32xf32>,
    %c0_94 = arith.constant 0 : index
    %c0_95 = arith.constant 0 : index
    %c13 = arith.constant 13 : index
    %c0_96 = arith.constant 0 : index
    %89 = vector.load %arg7[%c0_94, %c0_95, %c13, %c0_96] : memref<1x4x16x32xf32, #tpu.memory_space<vmem>>, vector<1x2x1x32xf32>
    %90 = vector.shape_cast %89 : vector<1x2x1x32xf32> to vector<2x32xf32>
    %91 = vector.shape_cast %85 : vector<2x32xf32> to vector<1x2x1x32xf32>
    tpu.vector_store %arg7[%c0_94, %c0_95, %c13, %c0_96], %91 {strides = array<i32>} : memref<1x4x16x32xf32, #tpu.memory_space<vmem>>, vector<1x2x1x32xf32>,
    %c0_97 = arith.constant 0 : index
    %c0_98 = arith.constant 0 : index
    %c7_99 = arith.constant 7 : index
    %c0_100 = arith.constant 0 : index
    %92 = vector.load %arg5[%c0_97, %c0_98, %c7_99, %c0_100] : memref<1x4x8x16xf32, #tpu.memory_space<vmem>>, vector<1x4x1x16xf32>
    %93 = vector.shape_cast %92 : vector<1x4x1x16xf32> to vector<4x16xf32>
    %cst_101 = arith.constant dense<0.000000e+00> : vector<2x16xf32>
    %94 = tpu.matmul %5, %93, %cst_101 {dimension_numbers = #tpu.dot_dimension_numbers<[1], [0], [0], [1], [0, 0, 1, 1], [], []>} : vector<2x4xf32>, vector<4x16xf32>, vector<2x16xf32> -> vector<2x16xf32>
    %95 = vector.broadcast %6 : vector<2x1xf32> to vector<2x16xf32>
    %96 = arith.addf %94, %95 : vector<2x16xf32>
    %cst_102 = arith.constant dense<0.000000e+00> : vector<2x32xf32>
    %97 = tpu.matmul %96, %7, %cst_102 {dimension_numbers = #tpu.dot_dimension_numbers<[1], [0], [0], [1], [0, 0, 1, 1], [], []>} : vector<2x16xf32>, vector<16x32xf32>, vector<2x32xf32> -> vector<2x32xf32>
    %c0_103 = arith.constant 0 : index
    %c0_104 = arith.constant 0 : index
    %c14 = arith.constant 14 : index
    %c0_105 = arith.constant 0 : index
    %98 = vector.load %arg7[%c0_103, %c0_104, %c14, %c0_105] : memref<1x4x16x32xf32, #tpu.memory_space<vmem>>, vector<1x2x1x32xf32>
    %99 = vector.shape_cast %98 : vector<1x2x1x32xf32> to vector<2x32xf32>
    %100 = vector.shape_cast %97 : vector<2x32xf32> to vector<1x2x1x32xf32>
    tpu.vector_store %arg7[%c0_103, %c0_104, %c14, %c0_105], %100 {strides = array<i32>} : memref<1x4x16x32xf32, #tpu.memory_space<vmem>>, vector<1x2x1x32xf32>,
    %c0_106 = arith.constant 0 : index
    %c0_107 = arith.constant 0 : index
    %c15 = arith.constant 15 : index
    %c0_108 = arith.constant 0 : index
    %101 = vector.load %arg7[%c0_106, %c0_107, %c15, %c0_108] : memref<1x4x16x32xf32, #tpu.memory_space<vmem>>, vector<1x2x1x32xf32>
    %102 = vector.shape_cast %101 : vector<1x2x1x32xf32> to vector<2x32xf32>
    %103 = vector.shape_cast %97 : vector<2x32xf32> to vector<1x2x1x32xf32>
    tpu.vector_store %arg7[%c0_106, %c0_107, %c15, %c0_108], %103 {strides = array<i32>} : memref<1x4x16x32xf32, #tpu.memory_space<vmem>>, vector<1x2x1x32xf32>,
    return
  }
  func.func @transform_0(%arg0: i32, %arg1: i32) -> (i32, i32) {
    %c0_i32 = arith.constant 0 : i32
    %c0_i32_0 = arith.constant 0 : i32
    %c0_i32_1 = arith.constant 0 : i32
    return %c0_i32, %c0_i32_0 : i32, i32
  }
  func.func @transform_1(%arg0: i32, %arg1: i32) -> (i32, i32) {
    %c0_i32 = arith.constant 0 : i32
    %c0_i32_0 = arith.constant 0 : i32
    %c0_i32_1 = arith.constant 0 : i32
    return %c0_i32, %c0_i32_0 : i32, i32
  }
  func.func @transform_2(%arg0: i32, %arg1: i32) -> (i32, i32) {
    %c0_i32 = arith.constant 0 : i32
    %c0_i32_0 = arith.constant 0 : i32
    %c0_i32_1 = arith.constant 0 : i32
    return %c0_i32, %c0_i32_0 : i32, i32
  }
  func.func @transform_3(%arg0: i32, %arg1: i32) -> (i32, i32, i32, i32) {
    %c0_i32 = arith.constant 0 : i32
    %c0_i32_0 = arith.constant 0 : i32
    %c0_i32_1 = arith.constant 0 : i32
    return %arg0, %c0_i32, %arg1, %c0_i32_0 : i32, i32, i32, i32
  }
  func.func @transform_4(%arg0: i32, %arg1: i32) -> (i32, i32, i32, i32) {
    %c0_i32 = arith.constant 0 : i32
    %c0_i32_0 = arith.constant 0 : i32
    %c0_i32_1 = arith.constant 0 : i32
    return %arg0, %c0_i32, %arg1, %c0_i32_0 : i32, i32, i32, i32
  }
  func.func @transform_5(%arg0: i32, %arg1: i32) -> (i32, i32, i32, i32) {
    %c0_i32 = arith.constant 0 : i32
    %c0_i32_0 = arith.constant 0 : i32
    %c0_i32_1 = arith.constant 0 : i32
    return %arg0, %c0_i32, %arg1, %c0_i32_0 : i32, i32, i32, i32
  }
}

</mosaic_0001>

<llo_original>
// kernel: upsample_forward.1
$region0: #{upsample_forward.1}
  #allocation0 [shape = 'u32[]', space=smem, size = 0x4, offset = 0x4, fixed_abs, tag = 'smem constant byte address 0x4 - core index']
  #allocation1 [shape = 'u32[144,128]{1,0:T(1,128)}', space=vmem, size = 0x12000, scoped, tag = 'internal scratch']
  #allocation8 [shape = 's32[]', space=sflag, size = 0x4, offset = 0, fixed_abs, tag = 'sflag constant byte address 0x0 - dummy sync flag']
  #allocation10 [shape = 's32[]', space=sflag, size = 0x4, offset = 0, fixed_abs, tag = 'sflag constant byte address 0x0 - dummy sync flag']
  %s0 = inlined_call_operand.vmem [shape: f32[2,4], index: 0, kind: input, shape index: {}]
  %s1 = inlined_call_operand.vmem [shape: f32[2,1], index: 1, kind: input, shape index: {}]
  %s2 = inlined_call_operand.vmem [shape: f32[16,32], index: 2, kind: input, shape index: {}]
  %s3 = inlined_call_operand.hbm [shape: f32[2,4,16,16], index: 3, kind: input, shape index: {}]
  %s4 = inlined_call_operand.hbm [shape: f32[2,2,32,32], index: 4, kind: input, shape index: {}]
  %s5 = inlined_call_operand.hbm [shape: f32[2,4,32,32], index: 5, kind: output, shape index: {}]
  %s6 = sld [smem:[#allocation0]]
  $region61: #{upsample_forward.1} parent=0
    _
  %s8 = ssub.s32 1, %s6
  %s9 = scalar_select 0, %s8, %s6
  $region1: #{upsample_forward.1} parent=0
    #allocation2 [shape = 'u8[32768]{0}', space=vmem, size = 0x8000, scoped, tag = 'input window, operand 3']
    #allocation3 [shape = 's32[2]{0}', space=sflag, size = 0x8, scoped, tag = 'scoped memory for upsample_forward.1']
    #allocation4 [shape = 's32[2]{0}', space=sflag, size = 0x8, scoped, tag = 'scoped memory for upsample_forward.1']
    #allocation5 [shape = 'u8[32768]{0}', space=vmem, size = 0x8000, scoped, tag = 'input window, operand 4']
    #allocation6 [shape = 's32[2]{0}', space=sflag, size = 0x8, scoped, tag = 'scoped memory for upsample_forward.1']
    #allocation7 [shape = 'u8[65536]{0}', space=vmem, size = 0x10000, scoped, tag = 'output window, operand 0']
    %10 = vsyncpa [#allocation3], 0
    %s11 = scalar_lea.sflag [#allocation3], 1
    %12 = vsyncpa %s11, 0
    %13 = vsyncpa [#allocation6], 0
    %s14 = scalar_lea.sflag [#allocation6], 1
    %15 = vsyncpa %s14, 0
    %16 = vsyncpa [#allocation4], 0
    %s17 = scalar_lea.sflag [#allocation4], 1
    %18 = vsyncpa %s17, 0
    loop: start=0, step=1, limit=6
    $region2: #{upsample_forward.1} parent=1 // loop_pre_header
      _
    $region3: #{upsample_forward.1} parent=1 // loop_header
      %s20 = sphi 0, %s24
      %p21 = scmp.ge.s32.totalorder %s20, 6
      %s27 = sphi 0, %s39
      %s28 = sphi 0, %s35
      %s29 = sphi 0, %s27
      %s30 = sphi 0, %s28
      %s31 = sphi 0, %s29
      %s32 = sphi 0, %s30
      %s40 = sphi 0, %s40
      %s42 = sphi 0, %s40
      %s43 = sphi 0, %s42
      %s57 = sphi 0, %s43
      %s61 = sphi 0, %s61
      %s63 = sphi 0, %s61
      %s64 = sphi 0, %s63
      %s78 = sphi 0, %s64
      %s82 = sphi 0, %s82
      %s84 = sphi 0, %s82
      %s85 = sphi 0, %s84
      %s99 = sphi 0, %s85
      %s107 = sphi 0, %s109
      %s110 = sphi 0, %s107
      %s111 = sphi 0, %s110
      %s127 = sphi 0, %s111
      %s135 = sphi 0, %s137
      %s138 = sphi 0, %s135
      %s139 = sphi 0, %s138
      %s155 = sphi 0, %s139
      %s163 = sphi 0, %s165
      %s166 = sphi 0, %s163
      %s167 = sphi 0, %s166
      %s183 = sphi 0, %s167
    $region4: #{upsample_forward.1} parent=1 // loop_header_branch
      %23 = sbr.rel (%p21) target = $region8
    $region5: #{upsample_forward.1} parent=1 // loop_body
      %s25 = ssub.s32 %s20, 1
      %s26 = ssub.s32 %s20, 2
      %s33 = sadd.s32 1, %s28
      %p34 = scmp.ge.s32.totalorder %s33, 2
      %s35 = scalar_select %p34, 0, %s33
      %s36 = sadd.s32 1, %s27
      %s37 = scalar_select %p34, %s36, %s27
      %p38 = scmp.ge.s32.totalorder %s37, 2
      %s39 = scalar_select %p38, 0, %s37
      %s41 = sadd.s32 %s40, 1
      %p44 = scmp.eq.s32.totalorder %s20, 3
      %p45 = scmp.ne.s32.totalorder %s40, %s42
      %p46 = scmp.eq.s32.totalorder %s20, 0
      %p47 = por %p45, %p46
      %p48 = scmp.ne.s32.totalorder %s40, %s42
      %p49 = scmp.eq.s32.totalorder %s25, 3
      %p50 = por %p48, %p49
      %p51 = scmp.ne.s32.totalorder %s42, %s43
      %p52 = scmp.eq.s32.totalorder %s25, 0
      %p53 = por %p51, %p52
      %p54 = scmp.ne.s32.totalorder %s42, %s43
      %p55 = scmp.eq.s32.totalorder %s26, 3
      %p56 = por %p54, %p55
      %p58 = scmp.ne.s32.totalorder %s43, %s57
      %p59 = scmp.eq.s32.totalorder %s26, 0
      %p60 = por %p58, %p59
      %s62 = sadd.s32 %s61, 1
      %p65 = scmp.eq.s32.totalorder %s20, 3
      %p66 = scmp.ne.s32.totalorder %s61, %s63
      %p67 = scmp.eq.s32.totalorder %s20, 0
      %p68 = por %p66, %p67
      %p69 = scmp.ne.s32.totalorder %s61, %s63
      %p70 = scmp.eq.s32.totalorder %s25, 3
      %p71 = por %p69, %p70
      %p72 = scmp.ne.s32.totalorder %s63, %s64
      %p73 = scmp.eq.s32.totalorder %s25, 0
      %p74 = por %p72, %p73
      %p75 = scmp.ne.s32.totalorder %s63, %s64
      %p76 = scmp.eq.s32.totalorder %s26, 3
      %p77 = por %p75, %p76
      %p79 = scmp.ne.s32.totalorder %s64, %s78
      %p80 = scmp.eq.s32.totalorder %s26, 0
      %p81 = por %p79, %p80
      %s83 = sadd.s32 %s82, 1
      %p86 = scmp.eq.s32.totalorder %s20, 3
      %p87 = scmp.ne.s32.totalorder %s82, %s84
      %p88 = scmp.eq.s32.totalorder %s20, 0
      %p89 = por %p87, %p88
      %p90 = scmp.ne.s32.totalorder %s82, %s84
      %p91 = scmp.eq.s32.totalorder %s25, 3
      %p92 = por %p90, %p91
      %p93 = scmp.ne.s32.totalorder %s84, %s85
      %p94 = scmp.eq.s32.totalorder %s25, 0
      %p95 = por %p93, %p94
      %p96 = scmp.ne.s32.totalorder %s84, %s85
      %p97 = scmp.eq.s32.totalorder %s26, 3
      %p98 = por %p96, %p97
      %p100 = scmp.ne.s32.totalorder %s85, %s99
      %p101 = scmp.eq.s32.totalorder %s26, 0
      %p102 = por %p100, %p101
      %s103 = ssub.s32 %s27, %s39
      %s104 = ssub.s32 %s28, %s35
      %s105 = sor.u32 %s103, %s104
      %p106 = scmp.eq.s32.totalorder %s105, 0
      %s108 = sadd.s32 %s107, 1
      %s109 = scalar_select %p106, %s107, %s108
      %p112 = pneg %p106
      %p113 = scmp.eq.s32.totalorder %s20, 3
      %p114 = por %p112, %p113
      %p115 = scmp.ne.s32.totalorder %s107, %s110
      %p116 = scmp.eq.s32.totalorder %s20, 0
      %p117 = por %p115, %p116
      %p118 = scmp.ne.s32.totalorder %s107, %s110
      %p119 = scmp.eq.s32.totalorder %s25, 3
      %p120 = por %p118, %p119
      %p121 = scmp.ne.s32.totalorder %s110, %s111
      %p122 = scmp.eq.s32.totalorder %s25, 0
      %p123 = por %p121, %p122
      %p124 = scmp.ne.s32.totalorder %s110, %s111
      %p125 = scmp.eq.s32.totalorder %s26, 3
      %p126 = por %p124, %p125
      %p128 = scmp.ne.s32.totalorder %s111, %s127
      %p129 = scmp.eq.s32.totalorder %s26, 0
      %p130 = por %p128, %p129
      %s131 = ssub.s32 %s27, %s39
      %s132 = ssub.s32 %s28, %s35
      %s133 = sor.u32 %s131, %s132
      %p134 = scmp.eq.s32.totalorder %s133, 0
      %s136 = sadd.s32 %s135, 1
      %s137 = scalar_select %p134, %s135, %s136
      %p140 = pneg %p134
      %p141 = scmp.eq.s32.totalorder %s20, 3
      %p142 = por %p140, %p141
      %p143 = scmp.ne.s32.totalorder %s135, %s138
      %p144 = scmp.eq.s32.totalorder %s20, 0
      %p145 = por %p143, %p144
      %p146 = scmp.ne.s32.totalorder %s135, %s138
      %p147 = scmp.eq.s32.totalorder %s25, 3
      %p148 = por %p146, %p147
      %p149 = scmp.ne.s32.totalorder %s138, %s139
      %p150 = scmp.eq.s32.totalorder %s25, 0
      %p151 = por %p149, %p150
      %p152 = scmp.ne.s32.totalorder %s138, %s139
      %p153 = scmp.eq.s32.totalorder %s26, 3
      %p154 = por %p152, %p153
      %p156 = scmp.ne.s32.totalorder %s139, %s155
      %p157 = scmp.eq.s32.totalorder %s26, 0
      %p158 = por %p156, %p157
      %s159 = ssub.s32 %s27, %s39
      %s160 = ssub.s32 %s28, %s35
      %s161 = sor.u32 %s159, %s160
      %p162 = scmp.eq.s32.totalorder %s161, 0
      %s164 = sadd.s32 %s163, 1
      %s165 = scalar_select %p162, %s163, %s164
      %p168 = pneg %p162
      %p169 = scmp.eq.s32.totalorder %s20, 3
      %p170 = por %p168, %p169
      %p171 = scmp.ne.s32.totalorder %s163, %s166
      %p172 = scmp.eq.s32.totalorder %s20, 0
      %p173 = por %p171, %p172
      %p174 = scmp.ne.s32.totalorder %s163, %s166
      %p175 = scmp.eq.s32.totalorder %s25, 3
      %p176 = por %p174, %p175
      %p177 = scmp.ne.s32.totalorder %s166, %s167
      %p178 = scmp.eq.s32.totalorder %s25, 0
      %p179 = por %p177, %p178
      %p180 = scmp.ne.s32.totalorder %s166, %s167
      %p181 = scmp.eq.s32.totalorder %s26, 3
      %p182 = por %p180, %p181
      %p184 = scmp.ne.s32.totalorder %s167, %s183
      %p185 = scmp.eq.s32.totalorder %s26, 0
      %p186 = por %p184, %p185
      %p187 = scmp.le.s32.totalorder 1, %s20
      %p188 = scmp.lt.s32.totalorder %s20, 5
      %p189 = pnand %p187, %p188
      %p190 = pneg %p189
      // Predicated region
      $region9: #{upsample_forward.1} parent=5 // pred_check
        _
      $region10: #{upsample_forward.1} parent=5 // pred_check_branch
        %192 = sbr.rel (%p189) target = $region12
      $region11: #{upsample_forward.1} parent=5 // pred_region
        %s193 = ssub.s32 %s20, 1
        // Predicated region
        $region13: #{upsample_forward.1} parent=11 // pred_check
          %p194 = pneg %p53
        $region14: #{upsample_forward.1} parent=11 // pred_check_branch
          %196 = sbr.rel (%p194) target = $region16
        $region15: #{upsample_forward.1} parent=11 // pred_region
          _
        $region16: #{upsample_forward.1} parent=11 // pred_fallthru
          _
        // Predicated region
        $region17: #{upsample_forward.1} parent=11 // pred_check
          %p197 = pneg %p74
        $region18: #{upsample_forward.1} parent=11 // pred_check_branch
          %199 = sbr.rel (%p197) target = $region20
        $region19: #{upsample_forward.1} parent=11 // pred_region
          _
        $region20: #{upsample_forward.1} parent=11 // pred_fallthru
          _
        // Predicated region
        $region21: #{upsample_forward.1} parent=11 // pred_check
          %p200 = pneg %p95
        $region22: #{upsample_forward.1} parent=11 // pred_check_branch
          %202 = sbr.rel (%p200) target = $region24
        $region23: #{upsample_forward.1} parent=11 // pred_region
          _
        $region24: #{upsample_forward.1} parent=11 // pred_fallthru
          _
      $region12: #{upsample_forward.1} parent=5 // pred_fallthru
        _
      %p203 = scmp.lt.s32.totalorder %s20, 4
      // Predicated region
      $region25: #{upsample_forward.1} parent=5 // pred_check
        %p204 = pneg %p203
      $region26: #{upsample_forward.1} parent=5 // pred_check_branch
        %206 = sbr.rel (%p204) target = $region28
      $region27: #{upsample_forward.1} parent=5 // pred_region
        // Predicated region
        $region29: #{upsample_forward.1} parent=27 // pred_check
          %p207 = pneg %p117
        $region30: #{upsample_forward.1} parent=27 // pred_check_branch
          %209 = sbr.rel (%p207) target = $region32
        $region31: #{upsample_forward.1} parent=27 // pred_region
          %s210 = sand.u32 %s107, 1
          %s211 = scalar_lea.sflag [#allocation3], %s210
          %s212 = sand.u32 %s107, 1
          %s213 = smul.addr %s212, 32
          %s214 = scalar_lea.vmem [#allocation2], %s213
          %s216 = ssub.s32 512, 512
          %217 = vsyncadd %s211, %s216
          %s218 = smul.addr %s27, 8
          %s219 = sadd.s32 %s28, %s218
          %s220 = smul.addr %s219, 128
          %s221 = scalar_lea.hbm %s3, %s220
          %s222 = sshll.u32 %s214, 4
          %s223 = int_to_ptr.vmem [resolvable:$true] %s222
          %228 = dma.hbm_to_vmem [thread:$0]  %s221, 512, %s223, %s211, 256, 128, 8
        $region32: #{upsample_forward.1} parent=27 // pred_fallthru
          _
        // Predicated region
        $region33: #{upsample_forward.1} parent=27 // pred_check
          %p229 = pneg %p145
        $region34: #{upsample_forward.1} parent=27 // pred_check_branch
          %231 = sbr.rel (%p229) target = $region36
        $region35: #{upsample_forward.1} parent=27 // pred_region
          #allocation9 [shape = 'u32[6]{0}', space=smem, size = 0x18, scoped, tag = 'DMA stride descriptor']
          %s232 = sand.u32 %s135, 1
          %s233 = scalar_lea.sflag [#allocation6], %s232
          %s234 = sand.u32 %s135, 1
          %s235 = smul.addr %s234, 32
          %s236 = scalar_lea.vmem [#allocation5], %s235
          %s237 = smul.u32 2, %s28
          %s239 = ssub.s32 512, 512
          %240 = vsyncadd %s233, %s239
          %s241 = smul.addr %s27, 8
          %s242 = sadd.s32 %s237, %s241
          %s243 = smul.addr %s242, 128
          %s244 = scalar_lea.hbm %s4, %s243
          %s246 = sshll.u32 1, 14
          %s247 = sxor.u32 4294967295, %s246
          %s249 = sld [smem:[#allocation0]]
          %s250 = sadd.s32 2, %s249
          %s252 = sshll.u32 7, 26
          %s253 = sxor.u32 4294967295, %s252
          %s254 = sand.u32 0, %s253
          %s255 = sshll.u32 %s250, 26
          %s256 = sor.u32 %s254, %s255
          %s257 = sshll.u32 %s236, 4
          %s258 = int_to_ptr.vmem [resolvable:$true] %s257
          %264 = sst [smem:[#allocation9]] 512
          %s265 = scalar_lea.smem [#allocation9], 1
          %266 = sst [smem:[%s265]] 256
          %s267 = scalar_lea.smem [#allocation9], 2
          %268 = sst [smem:[%s267]] 2
          %s269 = scalar_lea.smem [#allocation9], 3
          %270 = sst [smem:[%s269]] 128
          %s271 = scalar_lea.smem [#allocation9], 4
          %272 = sst [smem:[%s271]] 128
          %s273 = scalar_lea.smem [#allocation9], 5
          %274 = sst [smem:[%s273]] 8
          %276 = dma.general %s244, 512, %s258, %s233, [#allocation8], [#allocation9], %s256, 0
        $region36: #{upsample_forward.1} parent=27 // pred_fallthru
          _
      $region28: #{upsample_forward.1} parent=5 // pred_fallthru
        _
      %p277 = scmp.le.s32.totalorder 1, %s20
      %p278 = scmp.lt.s32.totalorder %s20, 5
      %p279 = pnand %p277, %p278
      %p280 = pneg %p279
      // Predicated region
      $region37: #{upsample_forward.1} parent=5 // pred_check
        _
      $region38: #{upsample_forward.1} parent=5 // pred_check_branch
        %282 = sbr.rel (%p279) target = $region40
      $region39: #{upsample_forward.1} parent=5 // pred_region
        %s283 = ssub.s32 %s20, 1
        %s284 = sand.u32 %s110, 1
        %s285 = scalar_lea.sflag [#allocation3], %s284
        %s286 = sand.u32 %s110, 1
        %s287 = smul.addr %s286, 32
        %s288 = scalar_lea.vmem [#allocation2], %s287
        // Predicated region
        $region41: #{upsample_forward.1} parent=39 // pred_check
          %p289 = pneg %p123
        $region42: #{upsample_forward.1} parent=39 // pred_check_branch
          %291 = sbr.rel (%p289) target = $region44
        $region43: #{upsample_forward.1} parent=39 // pred_region
          %292 = dma.done %s285, 512
        $region44: #{upsample_forward.1} parent=39 // pred_fallthru
          _
        %s293 = sand.u32 %s138, 1
        %s294 = scalar_lea.sflag [#allocation6], %s293
        %s295 = sand.u32 %s138, 1
        %s296 = smul.addr %s295, 32
        %s297 = scalar_lea.vmem [#allocation5], %s296
        // Predicated region
        $region45: #{upsample_forward.1} parent=39 // pred_check
          %p298 = pneg %p151
        $region46: #{upsample_forward.1} parent=39 // pred_check_branch
          %300 = sbr.rel (%p298) target = $region48
        $region47: #{upsample_forward.1} parent=39 // pred_region
          %301 = dma.done %s294, 512
        $region48: #{upsample_forward.1} parent=39 // pred_fallthru
          _
        %p302 = pneg %p53
        %p303 = pneg %p50
        %p304 = pneg %p74
        %p305 = pneg %p71
        %p306 = pneg %p95
        %p307 = pneg %p92
        %s308 = sand.u32 %s110, 1
        %s309 = scalar_lea.sflag [#allocation3], %s308
        %s310 = sand.u32 %s110, 1
        %s311 = smul.addr %s310, 32
        %s312 = scalar_lea.vmem [#allocation2], %s311
        %p313 = pneg %p123
        %p314 = pneg %p120
        %s315 = sand.u32 %s138, 1
        %s316 = scalar_lea.sflag [#allocation6], %s315
        %s317 = sand.u32 %s138, 1
        %s318 = smul.addr %s317, 32
        %s319 = scalar_lea.vmem [#allocation5], %s318
        %p320 = pneg %p151
        %p321 = pneg %p148
        %p322 = pneg %p179
        %p323 = pneg %p176
        %s324 = sand.u32 %s166, 1
        %s325 = scalar_lea.sflag [#allocation4], %s324
        %s326 = sand.u32 %s166, 1
        %s327 = smul.addr %s326, 64
        %s328 = scalar_lea.vmem [#allocation7], %s327
        %s329 = smul.u32 2, %s30
        %s330 = smul.u32 2, %s30
        %v331 = vld [vmem:[%s297] sm:$0xff]
        %v332 = vld [vmem:[%s297 + $0x8] sm:$0xff]
        %v333 = vld [vmem:[%s297 + $0x10] sm:$0xff]
        %v334 = vld [vmem:[%s297 + $0x18] sm:$0xff]
        %s335 = scalar_lea.vmem %s328, 32 [#allocation7]
        %vm336 = vcmask 261120
        %337 = vst.msk [vmem:[%s335] sm:$0xff] %vm336, %v331
        %338 = vst.msk [vmem:[%s335 + $0x8] sm:$0xff] %vm336, %v332
        %339 = vst.msk [vmem:[%s335 + $0x10] sm:$0xff] %vm336, %v333
        %340 = vst.msk [vmem:[%s335 + $0x18] sm:$0xff] %vm336, %v334
        %v341 = vld [vmem:[%s0] sm:$0x3]
        %v342 = vld [vmem:[%s1] sm:$0x3]
        %v343 = vld [vmem:[%s2] sm:$0xff]
        %v344 = vld [vmem:[%s2 + $0x8] sm:$0xff]
        %v345 = vld [vmem:[%s288] sm:$0x1]
        %v346 = vld [vmem:[%s288 + $0x8] sm:$0x1]
        %v347 = vld [vmem:[%s288 + $0x10] sm:$0x1]
        %v348 = vld [vmem:[%s288 + $0x18] sm:$0x1]
        %350 = vset.pattern.permute.xlu0 0
        %351 = vperm.xlu0 %350, %v342
        %v352 = vpop.permute.xlu0 %351
        %v358 = vrot.slane %v346, 7
        %vm359 = vcmask 1041409
        %v360 = vsel %vm359, %v358, %v345
        %v361 = vrot.slane %v347, 6
        %vm362 = vcmask 1042434
        %v363 = vsel %vm362, %v361, %v360
        %v364 = vrot.slane %v348, 5
        %vm365 = vcmask 1043459
        %v366 = vsel %vm365, %v364, %v363
        %vm367 = vcmask 31744
        %v369 = vsel %vm367, %v341, 0
        %vm371 = vcmask 1043456
        %v372 = vsel %vm371, %v366, 0
        %374 = vmatprep.subr.mxu0 0.0
        %375 = vmatpush1.msra.mxu0 %v372
        %376 = vmatprep.subr.mxu0 0.0
        %377 = vmatpush1.msra.mxu0 0.0
        %378 = vmatprep.subr.mxu0 0.0
        %379 = vmatpush1.msra.mxu0 0.0
        %380 = vmatprep.subr.mxu0 0.0
        %381 = vmatpush1.msra.mxu0 0.0
        %382 = vmatprep.subr.mxu0 0.0
        %383 = vmatpush1.msra.mxu0 0.0
        %384 = vmatprep.subr.mxu0 0.0
        %385 = vmatpush1.msra.mxu0 0.0
        %386 = vmatprep.subr.mxu0 0.0
        %387 = vmatpush1.msra.mxu0 0.0
        %388 = vmatprep.subr.mxu0 0.0
        %389 = vmatpush1.msra.mxu0 0.0
        %390 = vmatprep.subr.mxu0 0.0
        %391 = vmatpush1.msra.mxu0 0.0
        %392 = vmatprep.subr.mxu0 0.0
        %393 = vmatpush1.msra.mxu0 0.0
        %394 = vmatprep.subr.mxu0 0.0
        %395 = vmatpush1.msra.mxu0 0.0
        %396 = vmatprep.subr.mxu0 0.0
        %397 = vmatpush1.msra.mxu0 0.0
        %398 = vmatprep.subr.mxu0 0.0
        %399 = vmatpush1.msra.mxu0 0.0
        %400 = vmatprep.subr.mxu0 0.0
        %401 = vmatpush1.msra.mxu0 0.0
        %402 = vmatprep.subr.mxu0 0.0
        %403 = vmatpush1.msra.mxu0 0.0
        %404 = vmatprep.subr.mxu0 0.0
        %405 = vmatpush1.msra.mxu0 0.0
        %406 = vmatprep.subr.mxu0 0.0
        %407 = vmatpush1.msra.mxu0 0.0
        %408 = vmatprep.subr.mxu0 0.0
        %409 = vmatpush1.msra.mxu0 0.0
        %410 = vmatprep.subr.mxu0 0.0
        %411 = vmatpush1.msra.mxu0 0.0
        %412 = vmatprep.subr.mxu0 0.0
        %413 = vmatpush1.msra.mxu0 0.0
        %414 = vmatprep.subr.mxu0 0.0
        %415 = vmatpush1.msra.mxu0 0.0
        %416 = vmatprep.subr.mxu0 0.0
        %417 = vmatpush1.msra.mxu0 0.0
        %418 = vmatprep.subr.mxu0 0.0
        %419 = vmatpush1.msra.mxu0 0.0
        %420 = vmatprep.subr.mxu0 0.0
        %421 = vmatpush1.msra.mxu0 0.0
        %422 = vmatprep.subr.mxu0 0.0
        %423 = vmatpush1.msra.mxu0 0.0
        %424 = vmatprep.subr.mxu0 0.0
        %425 = vmatpush1.msra.mxu0 0.0
        %426 = vmatprep.subr.mxu0 0.0
        %427 = vmatpush1.msra.mxu0 0.0
        %428 = vmatprep.subr.mxu0 0.0
        %429 = vmatpush1.msra.mxu0 0.0
        %430 = vmatprep.subr.mxu0 0.0
        %431 = vmatpush1.msra.mxu0 0.0
        %432 = vmatprep.subr.mxu0 0.0
        %433 = vmatpush1.msra.mxu0 0.0
        %434 = vmatprep.subr.mxu0 0.0
        %435 = vmatpush1.msra.mxu0 0.0
        %436 = vmatprep.subr.mxu0 0.0
        %437 = vmatpush1.msra.mxu0 0.0
        %438 = vmatprep.mubr.f32.mxu0 0.0
        %439 = vmatmul.mubr.f32.gmra.mrb[0].mxu0 %v369
        %v440 = vpop.f32.mrb[0].mxu0
        %v441 = vadd.f32 %v352, %v440
        %v442 = vpop.f32.mrb[0].mxu0
        %443 = vdwg.mxu0
        %vm444 = vcmask 130048
        %v446 = vsel %vm444, %v441, 0
        %448 = vmatprep.subr.mxu0 0.0
        %449 = vmatpush1.msra.mxu0 %v343
        %450 = vmatprep.subr.mxu0 0.0
        %451 = vmatpush1.msra.mxu0 %v344
        %452 = vmatprep.subr.mxu0 0.0
        %453 = vmatpush1.msra.mxu0 0.0
        %454 = vmatprep.subr.mxu0 0.0
        %455 = vmatpush1.msra.mxu0 0.0
        %456 = vmatprep.subr.mxu0 0.0
        %457 = vmatpush1.msra.mxu0 0.0
        %458 = vmatprep.subr.mxu0 0.0
        %459 = vmatpush1.msra.mxu0 0.0
        %460 = vmatprep.subr.mxu0 0.0
        %461 = vmatpush1.msra.mxu0 0.0
        %462 = vmatprep.subr.mxu0 0.0
        %463 = vmatpush1.msra.mxu0 0.0
        %464 = vmatprep.subr.mxu0 0.0
        %465 = vmatpush1.msra.mxu0 0.0
        %466 = vmatprep.subr.mxu0 0.0
        %467 = vmatpush1.msra.mxu0 0.0
        %468 = vmatprep.subr.mxu0 0.0
        %469 = vmatpush1.msra.mxu0 0.0
        %470 = vmatprep.subr.mxu0 0.0
        %471 = vmatpush1.msra.mxu0 0.0
        %472 = vmatprep.subr.mxu0 0.0
        %473 = vmatpush1.msra.mxu0 0.0
        %474 = vmatprep.subr.mxu0 0.0
        %475 = vmatpush1.msra.mxu0 0.0
        %476 = vmatprep.subr.mxu0 0.0
        %477 = vmatpush1.msra.mxu0 0.0
        %478 = vmatprep.subr.mxu0 0.0
        %479 = vmatpush1.msra.mxu0 0.0
        %480 = vmatprep.subr.mxu0 0.0
        %481 = vmatpush1.msra.mxu0 0.0
        %482 = vmatprep.subr.mxu0 0.0
        %483 = vmatpush1.msra.mxu0 0.0
        %484 = vmatprep.subr.mxu0 0.0
        %485 = vmatpush1.msra.mxu0 0.0
        %486 = vmatprep.subr.mxu0 0.0
        %487 = vmatpush1.msra.mxu0 0.0
        %488 = vmatprep.subr.mxu0 0.0
        %489 = vmatpush1.msra.mxu0 0.0
        %490 = vmatprep.subr.mxu0 0.0
        %491 = vmatpush1.msra.mxu0 0.0
        %492 = vmatprep.subr.mxu0 0.0
        %493 = vmatpush1.msra.mxu0 0.0
        %494 = vmatprep.subr.mxu0 0.0
        %495 = vmatpush1.msra.mxu0 0.0
        %496 = vmatprep.subr.mxu0 0.0
        %497 = vmatpush1.msra.mxu0 0.0
        %498 = vmatprep.subr.mxu0 0.0
        %499 = vmatpush1.msra.mxu0 0.0
        %500 = vmatprep.subr.mxu0 0.0
        %501 = vmatpush1.msra.mxu0 0.0
        %502 = vmatprep.subr.mxu0 0.0
        %503 = vmatpush1.msra.mxu0 0.0
        %504 = vmatprep.subr.mxu0 0.0
        %505 = vmatpush1.msra.mxu0 0.0
        %506 = vmatprep.subr.mxu0 0.0
        %507 = vmatpush1.msra.mxu0 0.0
        %508 = vmatprep.subr.mxu0 0.0
        %509 = vmatpush1.msra.mxu0 0.0
        %510 = vmatprep.subr.mxu0 0.0
        %511 = vmatpush1.msra.mxu0 0.0
        %512 = vmatprep.mubr.f32.mxu0 0.0
        %513 = vmatmul.mubr.f32.gmra.mrb[0].mxu0 %v446
        %v514 = vpop.f32.mrb[0].mxu0
        %v515 = vadd.f32 0.0, %v514
        %v516 = vpop.f32.mrb[0].mxu0
        %517 = vdwg.mxu0
        %v520 = vunpack.c.l.s4 1966171168
        %v521 = vunpack.c.0.s8 %v520
        %v522 = vlaneseq
        %v523 = vshrl.u32 %v522, 7
        %v524 = vsub.s32 %v521, %v523
        %v525 = vrot.slane %v515, %v524
        %v526 = vcombine.high %v525, %v525
        %v528 = vunpack.c.l.s4 1966171168
        %v529 = vunpack.c.0.s8 %v528
        %v530 = vlaneseq
        %v531 = vshrl.u32 %v530, 7
        %v532 = vsub.s32 %v529, %v531
        %v533 = vrot.slane %v525, %v532
        %v535 = vunpack.c.l.s4 1966171168
        %v536 = vunpack.c.0.s8 %v535
        %v537 = vlaneseq
        %v538 = vshrl.u32 %v537, 7
        %v539 = vsub.s32 %v536, %v538
        %v540 = vrot.slane %v526, %v539
        %vm543 = vcmask 253952
        %544 = vst.msk [vmem:[%s328] sm:$0x1] %vm543, %v533
        %545 = vst.msk [vmem:[%s328 + $0x10] sm:$0x1] %vm543, %v540
        %546 = vst.msk [vmem:[%s328 + $0x1] sm:$0x1] %vm543, %v533
        %547 = vst.msk [vmem:[%s328 + $0x11] sm:$0x1] %vm543, %v540
        %v548 = vld [vmem:[%s288 + $0x1] sm:$0x1]
        %v549 = vld [vmem:[%s288 + $0x9] sm:$0x1]
        %v550 = vld [vmem:[%s288 + $0x11] sm:$0x1]
        %v551 = vld [vmem:[%s288 + $0x19] sm:$0x1]
        %v556 = vrot.slane %v549, 7
        %v557 = vsel %vm359, %v556, %v548
        %v558 = vrot.slane %v550, 6
        %v559 = vsel %vm362, %v558, %v557
        %v560 = vrot.slane %v551, 5
        %v561 = vsel %vm365, %v560, %v559
        %v562 = vsel %vm371, %v561, 0
        %564 = vmatprep.subr.mxu0 0.0
        %565 = vmatpush1.msra.mxu0 %v562
        %566 = vmatprep.subr.mxu0 0.0
        %567 = vmatpush1.msra.mxu0 0.0
        %568 = vmatprep.subr.mxu0 0.0
        %569 = vmatpush1.msra.mxu0 0.0
        %570 = vmatprep.subr.mxu0 0.0
        %571 = vmatpush1.msra.mxu0 0.0
        %572 = vmatprep.subr.mxu0 0.0
        %573 = vmatpush1.msra.mxu0 0.0
        %574 = vmatprep.subr.mxu0 0.0
        %575 = vmatpush1.msra.mxu0 0.0
        %576 = vmatprep.subr.mxu0 0.0
        %577 = vmatpush1.msra.mxu0 0.0
        %578 = vmatprep.subr.mxu0 0.0
        %579 = vmatpush1.msra.mxu0 0.0
        %580 = vmatprep.subr.mxu0 0.0
        %581 = vmatpush1.msra.mxu0 0.0
        %582 = vmatprep.subr.mxu0 0.0
        %583 = vmatpush1.msra.mxu0 0.0
        %584 = vmatprep.subr.mxu0 0.0
        %585 = vmatpush1.msra.mxu0 0.0
        %586 = vmatprep.subr.mxu0 0.0
        %587 = vmatpush1.msra.mxu0 0.0
        %588 = vmatprep.subr.mxu0 0.0
        %589 = vmatpush1.msra.mxu0 0.0
        %590 = vmatprep.subr.mxu0 0.0
        %591 = vmatpush1.msra.mxu0 0.0
        %592 = vmatprep.subr.mxu0 0.0
        %593 = vmatpush1.msra.mxu0 0.0
        %594 = vmatprep.subr.mxu0 0.0
        %595 = vmatpush1.msra.mxu0 0.0
        %596 = vmatprep.subr.mxu0 0.0
        %597 = vmatpush1.msra.mxu0 0.0
        %598 = vmatprep.subr.mxu0 0.0
        %599 = vmatpush1.msra.mxu0 0.0
        %600 = vmatprep.subr.mxu0 0.0
        %601 = vmatpush1.msra.mxu0 0.0
        %602 = vmatprep.subr.mxu0 0.0
        %603 = vmatpush1.msra.mxu0 0.0
        %604 = vmatprep.subr.mxu0 0.0
        %605 = vmatpush1.msra.mxu0 0.0
        %606 = vmatprep.subr.mxu0 0.0
        %607 = vmatpush1.msra.mxu0 0.0
        %608 = vmatprep.subr.mxu0 0.0
        %609 = vmatpush1.msra.mxu0 0.0
        %610 = vmatprep.subr.mxu0 0.0
        %611 = vmatpush1.msra.mxu0 0.0
        %612 = vmatprep.subr.mxu0 0.0
        %613 = vmatpush1.msra.mxu0 0.0
        %614 = vmatprep.subr.mxu0 0.0
        %615 = vmatpush1.msra.mxu0 0.0
        %616 = vmatprep.subr.mxu0 0.0
        %617 = vmatpush1.msra.mxu0 0.0
        %618 = vmatprep.subr.mxu0 0.0
        %619 = vmatpush1.msra.mxu0 0.0
        %620 = vmatprep.subr.mxu0 0.0
        %621 = vmatpush1.msra.mxu0 0.0
        %622 = vmatprep.subr.mxu0 0.0
        %623 = vmatpush1.msra.mxu0 0.0
        %624 = vmatprep.subr.mxu0 0.0
        %625 = vmatpush1.msra.mxu0 0.0
        %626 = vmatprep.subr.mxu0 0.0
        %627 = vmatpush1.msra.mxu0 0.0
        %628 = vmatprep.mubr.f32.mxu0 0.0
        %629 = vmatmul.mubr.f32.gmra.mrb[0].mxu0 %v369
        %v630 = vpop.f32.mrb[0].mxu0
        %v631 = vadd.f32 %v352, %v630
        %v632 = vpop.f32.mrb[0].mxu0
        %633 = vdwg.mxu0
        %v635 = vsel %vm444, %v631, 0
        %637 = vmatprep.subr.mxu0 0.0
        %638 = vmatpush1.msra.mxu0 %v343
        %639 = vmatprep.subr.mxu0 0.0
        %640 = vmatpush1.msra.mxu0 %v344
        %641 = vmatprep.subr.mxu0 0.0
        %642 = vmatpush1.msra.mxu0 0.0
        %643 = vmatprep.subr.mxu0 0.0
        %644 = vmatpush1.msra.mxu0 0.0
        %645 = vmatprep.subr.mxu0 0.0
        %646 = vmatpush1.msra.mxu0 0.0
        %647 = vmatprep.subr.mxu0 0.0
        %648 = vmatpush1.msra.mxu0 0.0
        %649 = vmatprep.subr.mxu0 0.0
        %650 = vmatpush1.msra.mxu0 0.0
        %651 = vmatprep.subr.mxu0 0.0
        %652 = vmatpush1.msra.mxu0 0.0
        %653 = vmatprep.subr.mxu0 0.0
        %654 = vmatpush1.msra.mxu0 0.0
        %655 = vmatprep.subr.mxu0 0.0
        %656 = vmatpush1.msra.mxu0 0.0
        %657 = vmatprep.subr.mxu0 0.0
        %658 = vmatpush1.msra.mxu0 0.0
        %659 = vmatprep.subr.mxu0 0.0
        %660 = vmatpush1.msra.mxu0 0.0
        %661 = vmatprep.subr.mxu0 0.0
        %662 = vmatpush1.msra.mxu0 0.0
        %663 = vmatprep.subr.mxu0 0.0
        %664 = vmatpush1.msra.mxu0 0.0
        %665 = vmatprep.subr.mxu0 0.0
        %666 = vmatpush1.msra.mxu0 0.0
        %667 = vmatprep.subr.mxu0 0.0
        %668 = vmatpush1.msra.mxu0 0.0
        %669 = vmatprep.subr.mxu0 0.0
        %670 = vmatpush1.msra.mxu0 0.0
        %671 = vmatprep.subr.mxu0 0.0
        %672 = vmatpush1.msra.mxu0 0.0
        %673 = vmatprep.subr.mxu0 0.0
        %674 = vmatpush1.msra.mxu0 0.0
        %675 = vmatprep.subr.mxu0 0.0
        %676 = vmatpush1.msra.mxu0 0.0
        %677 = vmatprep.subr.mxu0 0.0
        %678 = vmatpush1.msra.mxu0 0.0
        %679 = vmatprep.subr.mxu0 0.0
        %680 = vmatpush1.msra.mxu0 0.0
        %681 = vmatprep.subr.mxu0 0.0
        %682 = vmatpush1.msra.mxu0 0.0
        %683 = vmatprep.subr.mxu0 0.0
        %684 = vmatpush1.msra.mxu0 0.0
        %685 = vmatprep.subr.mxu0 0.0
        %686 = vmatpush1.msra.mxu0 0.0
        %687 = vmatprep.subr.mxu0 0.0
        %688 = vmatpush1.msra.mxu0 0.0
        %689 = vmatprep.subr.mxu0 0.0
        %690 = vmatpush1.msra.mxu0 0.0
        %691 = vmatprep.subr.mxu0 0.0
        %692 = vmatpush1.msra.mxu0 0.0
        %693 = vmatprep.subr.mxu0 0.0
        %694 = vmatpush1.msra.mxu0 0.0
        %695 = vmatprep.subr.mxu0 0.0
        %696 = vmatpush1.msra.mxu0 0.0
        %697 = vmatprep.subr.mxu0 0.0
        %698 = vmatpush1.msra.mxu0 0.0
        %699 = vmatprep.subr.mxu0 0.0
        %700 = vmatpush1.msra.mxu0 0.0
        %701 = vmatprep.mubr.f32.mxu0 0.0
        %702 = vmatmul.mubr.f32.gmra.mrb[0].mxu0 %v635
        %v703 = vpop.f32.mrb[0].mxu0
        %v704 = vadd.f32 0.0, %v703
        %v705 = vpop.f32.mrb[0].mxu0
        %706 = vdwg.mxu0
        %v709 = vunpack.c.l.s4 1966171168
        %v710 = vunpack.c.0.s8 %v709
        %v711 = vlaneseq
        %v712 = vshrl.u32 %v711, 7
        %v713 = vsub.s32 %v710, %v712
        %v714 = vrot.slane %v704, %v713
        %v715 = vcombine.high %v714, %v714
        %v717 = vunpack.c.l.s4 1966171168
        %v718 = vunpack.c.0.s8 %v717
        %v719 = vlaneseq
        %v720 = vshrl.u32 %v719, 7
        %v721 = vsub.s32 %v718, %v720
        %v722 = vrot.slane %v714, %v721
        %v724 = vunpack.c.l.s4 1966171168
        %v725 = vunpack.c.0.s8 %v724
        %v726 = vlaneseq
        %v727 = vshrl.u32 %v726, 7
        %v728 = vsub.s32 %v725, %v727
        %v729 = vrot.slane %v715, %v728
        %732 = vst.msk [vmem:[%s328 + $0x2] sm:$0x1] %vm543, %v722
        %733 = vst.msk [vmem:[%s328 + $0x12] sm:$0x1] %vm543, %v729
        %734 = vst.msk [vmem:[%s328 + $0x3] sm:$0x1] %vm543, %v722
        %735 = vst.msk [vmem:[%s328 + $0x13] sm:$0x1] %vm543, %v729
        %v736 = vld [vmem:[%s288 + $0x2] sm:$0x1]
        %v737 = vld [vmem:[%s288 + $0xa] sm:$0x1]
        %v738 = vld [vmem:[%s288 + $0x12] sm:$0x1]
        %v739 = vld [vmem:[%s288 + $0x1a] sm:$0x1]
        %v744 = vrot.slane %v737, 7
        %v745 = vsel %vm359, %v744, %v736
        %v746 = vrot.slane %v738, 6
        %v747 = vsel %vm362, %v746, %v745
        %v748 = vrot.slane %v739, 5
        %v749 = vsel %vm365, %v748, %v747
        %v750 = vsel %vm371, %v749, 0
        %752 = vmatprep.subr.mxu0 0.0
        %753 = vmatpush1.msra.mxu0 %v750
        %754 = vmatprep.subr.mxu0 0.0
        %755 = vmatpush1.msra.mxu0 0.0
        %756 = vmatprep.subr.mxu0 0.0
        %757 = vmatpush1.msra.mxu0 0.0
        %758 = vmatprep.subr.mxu0 0.0
        %759 = vmatpush1.msra.mxu0 0.0
        %760 = vmatprep.subr.mxu0 0.0
        %761 = vmatpush1.msra.mxu0 0.0
        %762 = vmatprep.subr.mxu0 0.0
        %763 = vmatpush1.msra.mxu0 0.0
        %764 = vmatprep.subr.mxu0 0.0
        %765 = vmatpush1.msra.mxu0 0.0
        %766 = vmatprep.subr.mxu0 0.0
        %767 = vmatpush1.msra.mxu0 0.0
        %768 = vmatprep.subr.mxu0 0.0
        %769 = vmatpush1.msra.mxu0 0.0
        %770 = vmatprep.subr.mxu0 0.0
        %771 = vmatpush1.msra.mxu0 0.0
        %772 = vmatprep.subr.mxu0 0.0
        %773 = vmatpush1.msra.mxu0 0.0
        %774 = vmatprep.subr.mxu0 0.0
        %775 = vmatpush1.msra.mxu0 0.0
        %776 = vmatprep.subr.mxu0 0.0
        %777 = vmatpush1.msra.mxu0 0.0
        %778 = vmatprep.subr.mxu0 0.0
        %779 = vmatpush1.msra.mxu0 0.0
        %780 = vmatprep.subr.mxu0 0.0
        %781 = vmatpush1.msra.mxu0 0.0
        %782 = vmatprep.subr.mxu0 0.0
        %783 = vmatpush1.msra.mxu0 0.0
        %784 = vmatprep.subr.mxu0 0.0
        %785 = vmatpush1.msra.mxu0 0.0
        %786 = vmatprep.subr.mxu0 0.0
        %787 = vmatpush1.msra.mxu0 0.0
        %788 = vmatprep.subr.mxu0 0.0
        %789 = vmatpush1.msra.mxu0 0.0
        %790 = vmatprep.subr.mxu0 0.0
        %791 = vmatpush1.msra.mxu0 0.0
        %792 = vmatprep.subr.mxu0 0.0
        %793 = vmatpush1.msra.mxu0 0.0
        %794 = vmatprep.subr.mxu0 0.0
        %795 = vmatpush1.msra.mxu0 0.0
        %796 = vmatprep.subr.mxu0 0.0
        %797 = vmatpush1.msra.mxu0 0.0
        %798 = vmatprep.subr.mxu0 0.0
        %799 = vmatpush1.msra.mxu0 0.0
        %800 = vmatprep.subr.mxu0 0.0
        %801 = vmatpush1.msra.mxu0 0.0
        %802 = vmatprep.subr.mxu0 0.0
        %803 = vmatpush1.msra.mxu0 0.0
        %804 = vmatprep.subr.mxu0 0.0
        %805 = vmatpush1.msra.mxu0 0.0
        %806 = vmatprep.subr.mxu0 0.0
        %807 = vmatpush1.msra.mxu0 0.0
        %808 = vmatprep.subr.mxu0 0.0
        %809 = vmatpush1.msra.mxu0 0.0
        %810 = vmatprep.subr.mxu0 0.0
        %811 = vmatpush1.msra.mxu0 0.0
        %812 = vmatprep.subr.mxu0 0.0
        %813 = vmatpush1.msra.mxu0 0.0
        %814 = vmatprep.subr.mxu0 0.0
        %815 = vmatpush1.msra.mxu0 0.0
        %816 = vmatprep.mubr.f32.mxu0 0.0
        %817 = vmatmul.mubr.f32.gmra.mrb[0].mxu0 %v369
        %v818 = vpop.f32.mrb[0].mxu0
        %v819 = vadd.f32 %v352, %v818
        %v820 = vpop.f32.mrb[0].mxu0
        %821 = vdwg.mxu0
        %v823 = vsel %vm444, %v819, 0
        %825 = vmatprep.subr.mxu0 0.0
        %826 = vmatpush1.msra.mxu0 %v343
        %827 = vmatprep.subr.mxu0 0.0
        %828 = vmatpush1.msra.mxu0 %v344
        %829 = vmatprep.subr.mxu0 0.0
        %830 = vmatpush1.msra.mxu0 0.0
        %831 = vmatprep.subr.mxu0 0.0
        %832 = vmatpush1.msra.mxu0 0.0
        %833 = vmatprep.subr.mxu0 0.0
        %834 = vmatpush1.msra.mxu0 0.0
        %835 = vmatprep.subr.mxu0 0.0
        %836 = vmatpush1.msra.mxu0 0.0
        %837 = vmatprep.subr.mxu0 0.0
        %838 = vmatpush1.msra.mxu0 0.0
        %839 = vmatprep.subr.mxu0 0.0
        %840 = vmatpush1.msra.mxu0 0.0
        %841 = vmatprep.subr.mxu0 0.0
        %842 = vmatpush1.msra.mxu0 0.0
        %843 = vmatprep.subr.mxu0 0.0
        %844 = vmatpush1.msra.mxu0 0.0
        %845 = vmatprep.subr.mxu0 0.0
        %846 = vmatpush1.msra.mxu0 0.0
        %847 = vmatprep.subr.mxu0 0.0
        %848 = vmatpush1.msra.mxu0 0.0
        %849 = vmatprep.subr.mxu0 0.0
        %850 = vmatpush1.msra.mxu0 0.0
        %851 = vmatprep.subr.mxu0 0.0
        %852 = vmatpush1.msra.mxu0 0.0
        %853 = vmatprep.subr.mxu0 0.0
        %854 = vmatpush1.msra.mxu0 0.0
        %855 = vmatprep.subr.mxu0 0.0
        %856 = vmatpush1.msra.mxu0 0.0
        %857 = vmatprep.subr.mxu0 0.0
        %858 = vmatpush1.msra.mxu0 0.0
        %859 = vmatprep.subr.mxu0 0.0
        %860 = vmatpush1.msra.mxu0 0.0
        %861 = vmatprep.subr.mxu0 0.0
        %862 = vmatpush1.msra.mxu0 0.0
        %863 = vmatprep.subr.mxu0 0.0
        %864 = vmatpush1.msra.mxu0 0.0
        %865 = vmatprep.subr.mxu0 0.0
        %866 = vmatpush1.msra.mxu0 0.0
        %867 = vmatprep.subr.mxu0 0.0
        %868 = vmatpush1.msra.mxu0 0.0
        %869 = vmatprep.subr.mxu0 0.0
        %870 = vmatpush1.msra.mxu0 0.0
        %871 = vmatprep.subr.mxu0 0.0
        %872 = vmatpush1.msra.mxu0 0.0
        %873 = vmatprep.subr.mxu0 0.0
        %874 = vmatpush1.msra.mxu0 0.0
        %875 = vmatprep.subr.mxu0 0.0
        %876 = vmatpush1.msra.mxu0 0.0
        %877 = vmatprep.subr.mxu0 0.0
        %878 = vmatpush1.msra.mxu0 0.0
        %879 = vmatprep.subr.mxu0 0.0
        %880 = vmatpush1.msra.mxu0 0.0
        %881 = vmatprep.subr.mxu0 0.0
        %882 = vmatpush1.msra.mxu0 0.0
        %883 = vmatprep.subr.mxu0 0.0
        %884 = vmatpush1.msra.mxu0 0.0
        %885 = vmatprep.subr.mxu0 0.0
        %886 = vmatpush1.msra.mxu0 0.0
        %887 = vmatprep.subr.mxu0 0.0
        %888 = vmatpush1.msra.mxu0 0.0
        %889 = vmatprep.mubr.f32.mxu0 0.0
        %890 = vmatmul.mubr.f32.gmra.mrb[0].mxu0 %v823
        %v891 = vpop.f32.mrb[0].mxu0
        %v892 = vadd.f32 0.0, %v891
        %v893 = vpop.f32.mrb[0].mxu0
        %894 = vdwg.mxu0
        %v897 = vunpack.c.l.s4 1966171168
        %v898 = vunpack.c.0.s8 %v897
        %v899 = vlaneseq
        %v900 = vshrl.u32 %v899, 7
        %v901 = vsub.s32 %v898, %v900
        %v902 = vrot.slane %v892, %v901
        %v903 = vcombine.high %v902, %v902
        %v905 = vunpack.c.l.s4 1966171168
        %v906 = vunpack.c.0.s8 %v905
        %v907 = vlaneseq
        %v908 = vshrl.u32 %v907, 7
        %v909 = vsub.s32 %v906, %v908
        %v910 = vrot.slane %v902, %v909
        %v912 = vunpack.c.l.s4 1966171168
        %v913 = vunpack.c.0.s8 %v912
        %v914 = vlaneseq
        %v915 = vshrl.u32 %v914, 7
        %v916 = vsub.s32 %v913, %v915
        %v917 = vrot.slane %v903, %v916
        %920 = vst.msk [vmem:[%s328 + $0x4] sm:$0x1] %vm543, %v910
        %921 = vst.msk [vmem:[%s328 + $0x14] sm:$0x1] %vm543, %v917
        %922 = vst.msk [vmem:[%s328 + $0x5] sm:$0x1] %vm543, %v910
        %923 = vst.msk [vmem:[%s328 + $0x15] sm:$0x1] %vm543, %v917
        %v924 = vld [vmem:[%s288 + $0x3] sm:$0x1]
        %v925 = vld [vmem:[%s288 + $0xb] sm:$0x1]
        %v926 = vld [vmem:[%s288 + $0x13] sm:$0x1]
        %v927 = vld [vmem:[%s288 + $0x1b] sm:$0x1]
        %v932 = vrot.slane %v925, 7
        %v933 = vsel %vm359, %v932, %v924
        %v934 = vrot.slane %v926, 6
        %v935 = vsel %vm362, %v934, %v933
        %v936 = vrot.slane %v927, 5
        %v937 = vsel %vm365, %v936, %v935
        %v938 = vsel %vm371, %v937, 0
        %940 = vmatprep.subr.mxu0 0.0
        %941 = vmatpush1.msra.mxu0 %v938
        %942 = vmatprep.subr.mxu0 0.0
        %943 = vmatpush1.msra.mxu0 0.0
        %944 = vmatprep.subr.mxu0 0.0
        %945 = vmatpush1.msra.mxu0 0.0
        %946 = vmatprep.subr.mxu0 0.0
        %947 = vmatpush1.msra.mxu0 0.0
        %948 = vmatprep.subr.mxu0 0.0
        %949 = vmatpush1.msra.mxu0 0.0
        %950 = vmatprep.subr.mxu0 0.0
        %951 = vmatpush1.msra.mxu0 0.0
        %952 = vmatprep.subr.mxu0 0.0
        %953 = vmatpush1.msra.mxu0 0.0
        %954 = vmatprep.subr.mxu0 0.0
        %955 = vmatpush1.msra.mxu0 0.0
        %956 = vmatprep.subr.mxu0 0.0
        %957 = vmatpush1.msra.mxu0 0.0
        %958 = vmatprep.subr.mxu0 0.0
        %959 = vmatpush1.msra.mxu0 0.0
        %960 = vmatprep.subr.mxu0 0.0
        %961 = vmatpush1.msra.mxu0 0.0
        %962 = vmatprep.subr.mxu0 0.0
        %963 = vmatpush1.msra.mxu0 0.0
        %964 = vmatprep.subr.mxu0 0.0
        %965 = vmatpush1.msra.mxu0 0.0
        %966 = vmatprep.subr.mxu0 0.0
        %967 = vmatpush1.msra.mxu0 0.0
        %968 = vmatprep.subr.mxu0 0.0
        %969 = vmatpush1.msra.mxu0 0.0
        %970 = vmatprep.subr.mxu0 0.0
        %971 = vmatpush1.msra.mxu0 0.0
        %972 = vmatprep.subr.mxu0 0.0
        %973 = vmatpush1.msra.mxu0 0.0
        %974 = vmatprep.subr.mxu0 0.0
        %975 = vmatpush1.msra.mxu0 0.0
        %976 = vmatprep.subr.mxu0 0.0
        %977 = vmatpush1.msra.mxu0 0.0
        %978 = vmatprep.subr.mxu0 0.0
        %979 = vmatpush1.msra.mxu0 0.0
        %980 = vmatprep.subr.mxu0 0.0
        %981 = vmatpush1.msra.mxu0 0.0
        %982 = vmatprep.subr.mxu0 0.0
        %983 = vmatpush1.msra.mxu0 0.0
        %984 = vmatprep.subr.mxu0 0.0
        %985 = vmatpush1.msra.mxu0 0.0
        %986 = vmatprep.subr.mxu0 0.0
        %987 = vmatpush1.msra.mxu0 0.0
        %988 = vmatprep.subr.mxu0 0.0
        %989 = vmatpush1.msra.mxu0 0.0
        %990 = vmatprep.subr.mxu0 0.0
        %991 = vmatpush1.msra.mxu0 0.0
        %992 = vmatprep.subr.mxu0 0.0
        %993 = vmatpush1.msra.mxu0 0.0
        %994 = vmatprep.subr.mxu0 0.0
        %995 = vmatpush1.msra.mxu0 0.0
        %996 = vmatprep.subr.mxu0 0.0
        %997 = vmatpush1.msra.mxu0 0.0
        %998 = vmatprep.subr.mxu0 0.0
        %999 = vmatpush1.msra.mxu0 0.0
        %1000 = vmatprep.subr.mxu0 0.0
        %1001 = vmatpush1.msra.mxu0 0.0
        %1002 = vmatprep.subr.mxu0 0.0
        %1003 = vmatpush1.msra.mxu0 0.0
        %1004 = vmatprep.mubr.f32.mxu0 0.0
        %1005 = vmatmul.mubr.f32.gmra.mrb[0].mxu0 %v369
        %v1006 = vpop.f32.mrb[0].mxu0
        %v1007 = vadd.f32 %v352, %v1006
        %v1008 = vpop.f32.mrb[0].mxu0
        %1009 = vdwg.mxu0
        %v1011 = vsel %vm444, %v1007, 0
        %1013 = vmatprep.subr.mxu0 0.0
        %1014 = vmatpush1.msra.mxu0 %v343
        %1015 = vmatprep.subr.mxu0 0.0
        %1016 = vmatpush1.msra.mxu0 %v344
        %1017 = vmatprep.subr.mxu0 0.0
        %1018 = vmatpush1.msra.mxu0 0.0
        %1019 = vmatprep.subr.mxu0 0.0
        %1020 = vmatpush1.msra.mxu0 0.0
        %1021 = vmatprep.subr.mxu0 0.0
        %1022 = vmatpush1.msra.mxu0 0.0
        %1023 = vmatprep.subr.mxu0 0.0
        %1024 = vmatpush1.msra.mxu0 0.0
        %1025 = vmatprep.subr.mxu0 0.0
        %1026 = vmatpush1.msra.mxu0 0.0
        %1027 = vmatprep.subr.mxu0 0.0
        %1028 = vmatpush1.msra.mxu0 0.0
        %1029 = vmatprep.subr.mxu0 0.0
        %1030 = vmatpush1.msra.mxu0 0.0
        %1031 = vmatprep.subr.mxu0 0.0
        %1032 = vmatpush1.msra.mxu0 0.0
        %1033 = vmatprep.subr.mxu0 0.0
        %1034 = vmatpush1.msra.mxu0 0.0
        %1035 = vmatprep.subr.mxu0 0.0
        %1036 = vmatpush1.msra.mxu0 0.0
        %1037 = vmatprep.subr.mxu0 0.0
        %1038 = vmatpush1.msra.mxu0 0.0
        %1039 = vmatprep.subr.mxu0 0.0
        %1040 = vmatpush1.msra.mxu0 0.0
        %1041 = vmatprep.subr.mxu0 0.0
        %1042 = vmatpush1.msra.mxu0 0.0
        %1043 = vmatprep.subr.mxu0 0.0
        %1044 = vmatpush1.msra.mxu0 0.0
        %1045 = vmatprep.subr.mxu0 0.0
        %1046 = vmatpush1.msra.mxu0 0.0
        %1047 = vmatprep.subr.mxu0 0.0
        %1048 = vmatpush1.msra.mxu0 0.0
        %1049 = vmatprep.subr.mxu0 0.0
        %1050 = vmatpush1.msra.mxu0 0.0
        %1051 = vmatprep.subr.mxu0 0.0
        %1052 = vmatpush1.msra.mxu0 0.0
        %1053 = vmatprep.subr.mxu0 0.0
        %1054 = vmatpush1.msra.mxu0 0.0
        %1055 = vmatprep.subr.mxu0 0.0
        %1056 = vmatpush1.msra.mxu0 0.0
        %1057 = vmatprep.subr.mxu0 0.0
        %1058 = vmatpush1.msra.mxu0 0.0
        %1059 = vmatprep.subr.mxu0 0.0
        %1060 = vmatpush1.msra.mxu0 0.0
        %1061 = vmatprep.subr.mxu0 0.0
        %1062 = vmatpush1.msra.mxu0 0.0
        %1063 = vmatprep.subr.mxu0 0.0
        %1064 = vmatpush1.msra.mxu0 0.0
        %1065 = vmatprep.subr.mxu0 0.0
        %1066 = vmatpush1.msra.mxu0 0.0
        %1067 = vmatprep.subr.mxu0 0.0
        %1068 = vmatpush1.msra.mxu0 0.0
        %1069 = vmatprep.subr.mxu0 0.0
        %1070 = vmatpush1.msra.mxu0 0.0
        %1071 = vmatprep.subr.mxu0 0.0
        %1072 = vmatpush1.msra.mxu0 0.0
        %1073 = vmatprep.subr.mxu0 0.0
        %1074 = vmatpush1.msra.mxu0 0.0
        %1075 = vmatprep.subr.mxu0 0.0
        %1076 = vmatpush1.msra.mxu0 0.0
        %1077 = vmatprep.mubr.f32.mxu0 0.0
        %1078 = vmatmul.mubr.f32.gmra.mrb[0].mxu0 %v1011
        %v1079 = vpop.f32.mrb[0].mxu0
        %v1080 = vadd.f32 0.0, %v1079
        %v1081 = vpop.f32.mrb[0].mxu0
        %1082 = vdwg.mxu0
        %v1085 = vunpack.c.l.s4 1966171168
        %v1086 = vunpack.c.0.s8 %v1085
        %v1087 = vlaneseq
        %v1088 = vshrl.u32 %v1087, 7
        %v1089 = vsub.s32 %v1086, %v1088
        %v1090 = vrot.slane %v1080, %v1089
        %v1091 = vcombine.high %v1090, %v1090
        %v1093 = vunpack.c.l.s4 1966171168
        %v1094 = vunpack.c.0.s8 %v1093
        %v1095 = vlaneseq
        %v1096 = vshrl.u32 %v1095, 7
        %v1097 = vsub.s32 %v1094, %v1096
        %v1098 = vrot.slane %v1090, %v1097
        %v1100 = vunpack.c.l.s4 1966171168
        %v1101 = vunpack.c.0.s8 %v1100
        %v1102 = vlaneseq
        %v1103 = vshrl.u32 %v1102, 7
        %v1104 = vsub.s32 %v1101, %v1103
        %v1105 = vrot.slane %v1091, %v1104
        %1108 = vst.msk [vmem:[%s328 + $0x6] sm:$0x1] %vm543, %v1098
        %1109 = vst.msk [vmem:[%s328 + $0x16] sm:$0x1] %vm543, %v1105
        %1110 = vst.msk [vmem:[%s328 + $0x7] sm:$0x1] %vm543, %v1098
        %1111 = vst.msk [vmem:[%s328 + $0x17] sm:$0x1] %vm543, %v1105
        %v1112 = vld [vmem:[%s288 + $0x4] sm:$0x1]
        %v1113 = vld [vmem:[%s288 + $0xc] sm:$0x1]
        %v1114 = vld [vmem:[%s288 + $0x14] sm:$0x1]
        %v1115 = vld [vmem:[%s288 + $0x1c] sm:$0x1]
        %v1120 = vrot.slane %v1113, 7
        %v1121 = vsel %vm359, %v1120, %v1112
        %v1122 = vrot.slane %v1114, 6
        %v1123 = vsel %vm362, %v1122, %v1121
        %v1124 = vrot.slane %v1115, 5
        %v1125 = vsel %vm365, %v1124, %v1123
        %v1126 = vsel %vm371, %v1125, 0
        %1128 = vmatprep.subr.mxu0 0.0
        %1129 = vmatpush1.msra.mxu0 %v1126
        %1130 = vmatprep.subr.mxu0 0.0
        %1131 = vmatpush1.msra.mxu0 0.0
        %1132 = vmatprep.subr.mxu0 0.0
        %1133 = vmatpush1.msra.mxu0 0.0
        %1134 = vmatprep.subr.mxu0 0.0
        %1135 = vmatpush1.msra.mxu0 0.0
        %1136 = vmatprep.subr.mxu0 0.0
        %1137 = vmatpush1.msra.mxu0 0.0
        %1138 = vmatprep.subr.mxu0 0.0
        %1139 = vmatpush1.msra.mxu0 0.0
        %1140 = vmatprep.subr.mxu0 0.0
        %1141 = vmatpush1.msra.mxu0 0.0
        %1142 = vmatprep.subr.mxu0 0.0
        %1143 = vmatpush1.msra.mxu0 0.0
        %1144 = vmatprep.subr.mxu0 0.0
        %1145 = vmatpush1.msra.mxu0 0.0
        %1146 = vmatprep.subr.mxu0 0.0
        %1147 = vmatpush1.msra.mxu0 0.0
        %1148 = vmatprep.subr.mxu0 0.0
        %1149 = vmatpush1.msra.mxu0 0.0
        %1150 = vmatprep.subr.mxu0 0.0
        %1151 = vmatpush1.msra.mxu0 0.0
        %1152 = vmatprep.subr.mxu0 0.0
        %1153 = vmatpush1.msra.mxu0 0.0
        %1154 = vmatprep.subr.mxu0 0.0
        %1155 = vmatpush1.msra.mxu0 0.0
        %1156 = vmatprep.subr.mxu0 0.0
        %1157 = vmatpush1.msra.mxu0 0.0
        %1158 = vmatprep.subr.mxu0 0.0
        %1159 = vmatpush1.msra.mxu0 0.0
        %1160 = vmatprep.subr.mxu0 0.0
        %1161 = vmatpush1.msra.mxu0 0.0
        %1162 = vmatprep.subr.mxu0 0.0
        %1163 = vmatpush1.msra.mxu0 0.0
        %1164 = vmatprep.subr.mxu0 0.0
        %1165 = vmatpush1.msra.mxu0 0.0
        %1166 = vmatprep.subr.mxu0 0.0
        %1167 = vmatpush1.msra.mxu0 0.0
        %1168 = vmatprep.subr.mxu0 0.0
        %1169 = vmatpush1.msra.mxu0 0.0
        %1170 = vmatprep.subr.mxu0 0.0
        %1171 = vmatpush1.msra.mxu0 0.0
        %1172 = vmatprep.subr.mxu0 0.0
        %1173 = vmatpush1.msra.mxu0 0.0
        %1174 = vmatprep.subr.mxu0 0.0
        %1175 = vmatpush1.msra.mxu0 0.0
        %1176 = vmatprep.subr.mxu0 0.0
        %1177 = vmatpush1.msra.mxu0 0.0
        %1178 = vmatprep.subr.mxu0 0.0
        %1179 = vmatpush1.msra.mxu0 0.0
        %1180 = vmatprep.subr.mxu0 0.0
        %1181 = vmatpush1.msra.mxu0 0.0
        %1182 = vmatprep.subr.mxu0 0.0
        %1183 = vmatpush1.msra.mxu0 0.0
        %1184 = vmatprep.subr.mxu0 0.0
        %1185 = vmatpush1.msra.mxu0 0.0
        %1186 = vmatprep.subr.mxu0 0.0
        %1187 = vmatpush1.msra.mxu0 0.0
        %1188 = vmatprep.subr.mxu0 0.0
        %1189 = vmatpush1.msra.mxu0 0.0
        %1190 = vmatprep.subr.mxu0 0.0
        %1191 = vmatpush1.msra.mxu0 0.0
        %1192 = vmatprep.mubr.f32.mxu0 0.0
        %1193 = vmatmul.mubr.f32.gmra.mrb[0].mxu0 %v369
        %v1194 = vpop.f32.mrb[0].mxu0
        %v1195 = vadd.f32 %v352, %v1194
        %v1196 = vpop.f32.mrb[0].mxu0
        %1197 = vdwg.mxu0
        %v1199 = vsel %vm444, %v1195, 0
        %1201 = vmatprep.subr.mxu0 0.0
        %1202 = vmatpush1.msra.mxu0 %v343
        %1203 = vmatprep.subr.mxu0 0.0
        %1204 = vmatpush1.msra.mxu0 %v344
        %1205 = vmatprep.subr.mxu0 0.0
        %1206 = vmatpush1.msra.mxu0 0.0
        %1207 = vmatprep.subr.mxu0 0.0
        %1208 = vmatpush1.msra.mxu0 0.0
        %1209 = vmatprep.subr.mxu0 0.0
        %1210 = vmatpush1.msra.mxu0 0.0
        %1211 = vmatprep.subr.mxu0 0.0
        %1212 = vmatpush1.msra.mxu0 0.0
        %1213 = vmatprep.subr.mxu0 0.0
        %1214 = vmatpush1.msra.mxu0 0.0
        %1215 = vmatprep.subr.mxu0 0.0
        %1216 = vmatpush1.msra.mxu0 0.0
        %1217 = vmatprep.subr.mxu0 0.0
        %1218 = vmatpush1.msra.mxu0 0.0
        %1219 = vmatprep.subr.mxu0 0.0
        %1220 = vmatpush1.msra.mxu0 0.0
        %1221 = vmatprep.subr.mxu0 0.0
        %1222 = vmatpush1.msra.mxu0 0.0
        %1223 = vmatprep.subr.mxu0 0.0
        %1224 = vmatpush1.msra.mxu0 0.0
        %1225 = vmatprep.subr.mxu0 0.0
        %1226 = vmatpush1.msra.mxu0 0.0
        %1227 = vmatprep.subr.mxu0 0.0
        %1228 = vmatpush1.msra.mxu0 0.0
        %1229 = vmatprep.subr.mxu0 0.0
        %1230 = vmatpush1.msra.mxu0 0.0
        %1231 = vmatprep.subr.mxu0 0.0
        %1232 = vmatpush1.msra.mxu0 0.0
        %1233 = vmatprep.subr.mxu0 0.0
        %1234 = vmatpush1.msra.mxu0 0.0
        %1235 = vmatprep.subr.mxu0 0.0
        %1236 = vmatpush1.msra.mxu0 0.0
        %1237 = vmatprep.subr.mxu0 0.0
        %1238 = vmatpush1.msra.mxu0 0.0
        %1239 = vmatprep.subr.mxu0 0.0
        %1240 = vmatpush1.msra.mxu0 0.0
        %1241 = vmatprep.subr.mxu0 0.0
        %1242 = vmatpush1.msra.mxu0 0.0
        %1243 = vmatprep.subr.mxu0 0.0
        %1244 = vmatpush1.msra.mxu0 0.0
        %1245 = vmatprep.subr.mxu0 0.0
        %1246 = vmatpush1.msra.mxu0 0.0
        %1247 = vmatprep.subr.mxu0 0.0
        %1248 = vmatpush1.msra.mxu0 0.0
        %1249 = vmatprep.subr.mxu0 0.0
        %1250 = vmatpush1.msra.mxu0 0.0
        %1251 = vmatprep.subr.mxu0 0.0
        %1252 = vmatpush1.msra.mxu0 0.0
        %1253 = vmatprep.subr.mxu0 0.0
        %1254 = vmatpush1.msra.mxu0 0.0
        %1255 = vmatprep.subr.mxu0 0.0
        %1256 = vmatpush1.msra.mxu0 0.0
        %1257 = vmatprep.subr.mxu0 0.0
        %1258 = vmatpush1.msra.mxu0 0.0
        %1259 = vmatprep.subr.mxu0 0.0
        %1260 = vmatpush1.msra.mxu0 0.0
        %1261 = vmatprep.subr.mxu0 0.0
        %1262 = vmatpush1.msra.mxu0 0.0
        %1263 = vmatprep.subr.mxu0 0.0
        %1264 = vmatpush1.msra.mxu0 0.0
        %1265 = vmatprep.mubr.f32.mxu0 0.0
        %1266 = vmatmul.mubr.f32.gmra.mrb[0].mxu0 %v1199
        %v1267 = vpop.f32.mrb[0].mxu0
        %v1268 = vadd.f32 0.0, %v1267
        %v1269 = vpop.f32.mrb[0].mxu0
        %1270 = vdwg.mxu0
        %v1273 = vunpack.c.l.s4 1966171168
        %v1274 = vunpack.c.0.s8 %v1273
        %v1275 = vlaneseq
        %v1276 = vshrl.u32 %v1275, 7
        %v1277 = vsub.s32 %v1274, %v1276
        %v1278 = vrot.slane %v1268, %v1277
        %v1279 = vcombine.high %v1278, %v1278
        %v1281 = vunpack.c.l.s4 1966171168
        %v1282 = vunpack.c.0.s8 %v1281
        %v1283 = vlaneseq
        %v1284 = vshrl.u32 %v1283, 7
        %v1285 = vsub.s32 %v1282, %v1284
        %v1286 = vrot.slane %v1278, %v1285
        %v1288 = vunpack.c.l.s4 1966171168
        %v1289 = vunpack.c.0.s8 %v1288
        %v1290 = vlaneseq
        %v1291 = vshrl.u32 %v1290, 7
        %v1292 = vsub.s32 %v1289, %v1291
        %v1293 = vrot.slane %v1279, %v1292
        %1296 = vst.msk [vmem:[%s328 + $0x8] sm:$0x1] %vm543, %v1286
        %1297 = vst.msk [vmem:[%s328 + $0x18] sm:$0x1] %vm543, %v1293
        %1298 = vst.msk [vmem:[%s328 + $0x9] sm:$0x1] %vm543, %v1286
        %1299 = vst.msk [vmem:[%s328 + $0x19] sm:$0x1] %vm543, %v1293
        %v1300 = vld [vmem:[%s288 + $0x5] sm:$0x1]
        %v1301 = vld [vmem:[%s288 + $0xd] sm:$0x1]
        %v1302 = vld [vmem:[%s288 + $0x15] sm:$0x1]
        %v1303 = vld [vmem:[%s288 + $0x1d] sm:$0x1]
        %v1308 = vrot.slane %v1301, 7
        %v1309 = vsel %vm359, %v1308, %v1300
        %v1310 = vrot.slane %v1302, 6
        %v1311 = vsel %vm362, %v1310, %v1309
        %v1312 = vrot.slane %v1303, 5
        %v1313 = vsel %vm365, %v1312, %v1311
        %v1314 = vsel %vm371, %v1313, 0
        %1316 = vmatprep.subr.mxu0 0.0
        %1317 = vmatpush1.msra.mxu0 %v1314
        %1318 = vmatprep.subr.mxu0 0.0
        %1319 = vmatpush1.msra.mxu0 0.0
        %1320 = vmatprep.subr.mxu0 0.0
        %1321 = vmatpush1.msra.mxu0 0.0
        %1322 = vmatprep.subr.mxu0 0.0
        %1323 = vmatpush1.msra.mxu0 0.0
        %1324 = vmatprep.subr.mxu0 0.0
        %1325 = vmatpush1.msra.mxu0 0.0
        %1326 = vmatprep.subr.mxu0 0.0
        %1327 = vmatpush1.msra.mxu0 0.0
        %1328 = vmatprep.subr.mxu0 0.0
        %1329 = vmatpush1.msra.mxu0 0.0
        %1330 = vmatprep.subr.mxu0 0.0
        %1331 = vmatpush1.msra.mxu0 0.0
        %1332 = vmatprep.subr.mxu0 0.0
        %1333 = vmatpush1.msra.mxu0 0.0
        %1334 = vmatprep.subr.mxu0 0.0
        %1335 = vmatpush1.msra.mxu0 0.0
        %1336 = vmatprep.subr.mxu0 0.0
        %1337 = vmatpush1.msra.mxu0 0.0
        %1338 = vmatprep.subr.mxu0 0.0
        %1339 = vmatpush1.msra.mxu0 0.0
        %1340 = vmatprep.subr.mxu0 0.0
        %1341 = vmatpush1.msra.mxu0 0.0
        %1342 = vmatprep.subr.mxu0 0.0
        %1343 = vmatpush1.msra.mxu0 0.0
        %1344 = vmatprep.subr.mxu0 0.0
        %1345 = vmatpush1.msra.mxu0 0.0
        %1346 = vmatprep.subr.mxu0 0.0
        %1347 = vmatpush1.msra.mxu0 0.0
        %1348 = vmatprep.subr.mxu0 0.0
        %1349 = vmatpush1.msra.mxu0 0.0
        %1350 = vmatprep.subr.mxu0 0.0
        %1351 = vmatpush1.msra.mxu0 0.0
        %1352 = vmatprep.subr.mxu0 0.0
        %1353 = vmatpush1.msra.mxu0 0.0
        %1354 = vmatprep.subr.mxu0 0.0
        %1355 = vmatpush1.msra.mxu0 0.0
        %1356 = vmatprep.subr.mxu0 0.0
        %1357 = vmatpush1.msra.mxu0 0.0
        %1358 = vmatprep.subr.mxu0 0.0
        %1359 = vmatpush1.msra.mxu0 0.0
        %1360 = vmatprep.subr.mxu0 0.0
        %1361 = vmatpush1.msra.mxu0 0.0
        %1362 = vmatprep.subr.mxu0 0.0
        %1363 = vmatpush1.msra.mxu0 0.0
        %1364 = vmatprep.subr.mxu0 0.0
        %1365 = vmatpush1.msra.mxu0 0.0
        %1366 = vmatprep.subr.mxu0 0.0
        %1367 = vmatpush1.msra.mxu0 0.0
        %1368 = vmatprep.subr.mxu0 0.0
        %1369 = vmatpush1.msra.mxu0 0.0
        %1370 = vmatprep.subr.mxu0 0.0
        %1371 = vmatpush1.msra.mxu0 0.0
        %1372 = vmatprep.subr.mxu0 0.0
        %1373 = vmatpush1.msra.mxu0 0.0
        %1374 = vmatprep.subr.mxu0 0.0
        %1375 = vmatpush1.msra.mxu0 0.0
        %1376 = vmatprep.subr.mxu0 0.0
        %1377 = vmatpush1.msra.mxu0 0.0
        %1378 = vmatprep.subr.mxu0 0.0
        %1379 = vmatpush1.msra.mxu0 0.0
        %1380 = vmatprep.mubr.f32.mxu0 0.0
        %1381 = vmatmul.mubr.f32.gmra.mrb[0].mxu0 %v369
        %v1382 = vpop.f32.mrb[0].mxu0
        %v1383 = vadd.f32 %v352, %v1382
        %v1384 = vpop.f32.mrb[0].mxu0
        %1385 = vdwg.mxu0
        %v1387 = vsel %vm444, %v1383, 0
        %1389 = vmatprep.subr.mxu0 0.0
        %1390 = vmatpush1.msra.mxu0 %v343
        %1391 = vmatprep.subr.mxu0 0.0
        %1392 = vmatpush1.msra.mxu0 %v344
        %1393 = vmatprep.subr.mxu0 0.0
        %1394 = vmatpush1.msra.mxu0 0.0
        %1395 = vmatprep.subr.mxu0 0.0
        %1396 = vmatpush1.msra.mxu0 0.0
        %1397 = vmatprep.subr.mxu0 0.0
        %1398 = vmatpush1.msra.mxu0 0.0
        %1399 = vmatprep.subr.mxu0 0.0
        %1400 = vmatpush1.msra.mxu0 0.0
        %1401 = vmatprep.subr.mxu0 0.0
        %1402 = vmatpush1.msra.mxu0 0.0
        %1403 = vmatprep.subr.mxu0 0.0
        %1404 = vmatpush1.msra.mxu0 0.0
        %1405 = vmatprep.subr.mxu0 0.0
        %1406 = vmatpush1.msra.mxu0 0.0
        %1407 = vmatprep.subr.mxu0 0.0
        %1408 = vmatpush1.msra.mxu0 0.0
        %1409 = vmatprep.subr.mxu0 0.0
        %1410 = vmatpush1.msra.mxu0 0.0
        %1411 = vmatprep.subr.mxu0 0.0
        %1412 = vmatpush1.msra.mxu0 0.0
        %1413 = vmatprep.subr.mxu0 0.0
        %1414 = vmatpush1.msra.mxu0 0.0
        %1415 = vmatprep.subr.mxu0 0.0
        %1416 = vmatpush1.msra.mxu0 0.0
        %1417 = vmatprep.subr.mxu0 0.0
        %1418 = vmatpush1.msra.mxu0 0.0
        %1419 = vmatprep.subr.mxu0 0.0
        %1420 = vmatpush1.msra.mxu0 0.0
        %1421 = vmatprep.subr.mxu0 0.0
        %1422 = vmatpush1.msra.mxu0 0.0
        %1423 = vmatprep.subr.mxu0 0.0
        %1424 = vmatpush1.msra.mxu0 0.0
        %1425 = vmatprep.subr.mxu0 0.0
        %1426 = vmatpush1.msra.mxu0 0.0
        %1427 = vmatprep.subr.mxu0 0.0
        %1428 = vmatpush1.msra.mxu0 0.0
        %1429 = vmatprep.subr.mxu0 0.0
        %1430 = vmatpush1.msra.mxu0 0.0
        %1431 = vmatprep.subr.mxu0 0.0
        %1432 = vmatpush1.msra.mxu0 0.0
        %1433 = vmatprep.subr.mxu0 0.0
        %1434 = vmatpush1.msra.mxu0 0.0
        %1435 = vmatprep.subr.mxu0 0.0
        %1436 = vmatpush1.msra.mxu0 0.0
        %1437 = vmatprep.subr.mxu0 0.0
        %1438 = vmatpush1.msra.mxu0 0.0
        %1439 = vmatprep.subr.mxu0 0.0
        %1440 = vmatpush1.msra.mxu0 0.0
        %1441 = vmatprep.subr.mxu0 0.0
        %1442 = vmatpush1.msra.mxu0 0.0
        %1443 = vmatprep.subr.mxu0 0.0
        %1444 = vmatpush1.msra.mxu0 0.0
        %1445 = vmatprep.subr.mxu0 0.0
        %1446 = vmatpush1.msra.mxu0 0.0
        %1447 = vmatprep.subr.mxu0 0.0
        %1448 = vmatpush1.msra.mxu0 0.0
        %1449 = vmatprep.subr.mxu0 0.0
        %1450 = vmatpush1.msra.mxu0 0.0
        %1451 = vmatprep.subr.mxu0 0.0
        %1452 = vmatpush1.msra.mxu0 0.0
        %1453 = vmatprep.mubr.f32.mxu0 0.0
        %1454 = vmatmul.mubr.f32.gmra.mrb[0].mxu0 %v1387
        %v1455 = vpop.f32.mrb[0].mxu0
        %v1456 = vadd.f32 0.0, %v1455
        %v1457 = vpop.f32.mrb[0].mxu0
        %1458 = vdwg.mxu0
        %v1461 = vunpack.c.l.s4 1966171168
        %v1462 = vunpack.c.0.s8 %v1461
        %v1463 = vlaneseq
        %v1464 = vshrl.u32 %v1463, 7
        %v1465 = vsub.s32 %v1462, %v1464
        %v1466 = vrot.slane %v1456, %v1465
        %v1467 = vcombine.high %v1466, %v1466
        %v1469 = vunpack.c.l.s4 1966171168
        %v1470 = vunpack.c.0.s8 %v1469
        %v1471 = vlaneseq
        %v1472 = vshrl.u32 %v1471, 7
        %v1473 = vsub.s32 %v1470, %v1472
        %v1474 = vrot.slane %v1466, %v1473
        %v1476 = vunpack.c.l.s4 1966171168
        %v1477 = vunpack.c.0.s8 %v1476
        %v1478 = vlaneseq
        %v1479 = vshrl.u32 %v1478, 7
        %v1480 = vsub.s32 %v1477, %v1479
        %v1481 = vrot.slane %v1467, %v1480
        %1484 = vst.msk [vmem:[%s328 + $0xa] sm:$0x1] %vm543, %v1474
        %1485 = vst.msk [vmem:[%s328 + $0x1a] sm:$0x1] %vm543, %v1481
        %1486 = vst.msk [vmem:[%s328 + $0xb] sm:$0x1] %vm543, %v1474
        %1487 = vst.msk [vmem:[%s328 + $0x1b] sm:$0x1] %vm543, %v1481
        %v1488 = vld [vmem:[%s288 + $0x6] sm:$0x1]
        %v1489 = vld [vmem:[%s288 + $0xe] sm:$0x1]
        %v1490 = vld [vmem:[%s288 + $0x16] sm:$0x1]
        %v1491 = vld [vmem:[%s288 + $0x1e] sm:$0x1]
        %v1496 = vrot.slane %v1489, 7
        %v1497 = vsel %vm359, %v1496, %v1488
        %v1498 = vrot.slane %v1490, 6
        %v1499 = vsel %vm362, %v1498, %v1497
        %v1500 = vrot.slane %v1491, 5
        %v1501 = vsel %vm365, %v1500, %v1499
        %v1502 = vsel %vm371, %v1501, 0
        %1504 = vmatprep.subr.mxu0 0.0
        %1505 = vmatpush1.msra.mxu0 %v1502
        %1506 = vmatprep.subr.mxu0 0.0
        %1507 = vmatpush1.msra.mxu0 0.0
        %1508 = vmatprep.subr.mxu0 0.0
        %1509 = vmatpush1.msra.mxu0 0.0
        %1510 = vmatprep.subr.mxu0 0.0
        %1511 = vmatpush1.msra.mxu0 0.0
        %1512 = vmatprep.subr.mxu0 0.0
        %1513 = vmatpush1.msra.mxu0 0.0
        %1514 = vmatprep.subr.mxu0 0.0
        %1515 = vmatpush1.msra.mxu0 0.0
        %1516 = vmatprep.subr.mxu0 0.0
        %1517 = vmatpush1.msra.mxu0 0.0
        %1518 = vmatprep.subr.mxu0 0.0
        %1519 = vmatpush1.msra.mxu0 0.0
        %1520 = vmatprep.subr.mxu0 0.0
        %1521 = vmatpush1.msra.mxu0 0.0
        %1522 = vmatprep.subr.mxu0 0.0
        %1523 = vmatpush1.msra.mxu0 0.0
        %1524 = vmatprep.subr.mxu0 0.0
        %1525 = vmatpush1.msra.mxu0 0.0
        %1526 = vmatprep.subr.mxu0 0.0
        %1527 = vmatpush1.msra.mxu0 0.0
        %1528 = vmatprep.subr.mxu0 0.0
        %1529 = vmatpush1.msra.mxu0 0.0
        %1530 = vmatprep.subr.mxu0 0.0
        %1531 = vmatpush1.msra.mxu0 0.0
        %1532 = vmatprep.subr.mxu0 0.0
        %1533 = vmatpush1.msra.mxu0 0.0
        %1534 = vmatprep.subr.mxu0 0.0
        %1535 = vmatpush1.msra.mxu0 0.0
        %1536 = vmatprep.subr.mxu0 0.0
        %1537 = vmatpush1.msra.mxu0 0.0
        %1538 = vmatprep.subr.mxu0 0.0
        %1539 = vmatpush1.msra.mxu0 0.0
        %1540 = vmatprep.subr.mxu0 0.0
        %1541 = vmatpush1.msra.mxu0 0.0
        %1542 = vmatprep.subr.mxu0 0.0
        %1543 = vmatpush1.msra.mxu0 0.0
        %1544 = vmatprep.subr.mxu0 0.0
        %1545 = vmatpush1.msra.mxu0 0.0
        %1546 = vmatprep.subr.mxu0 0.0
        %1547 = vmatpush1.msra.mxu0 0.0
        %1548 = vmatprep.subr.mxu0 0.0
        %1549 = vmatpush1.msra.mxu0 0.0
        %1550 = vmatprep.subr.mxu0 0.0
        %1551 = vmatpush1.msra.mxu0 0.0
        %1552 = vmatprep.subr.mxu0 0.0
        %1553 = vmatpush1.msra.mxu0 0.0
        %1554 = vmatprep.subr.mxu0 0.0
        %1555 = vmatpush1.msra.mxu0 0.0
        %1556 = vmatprep.subr.mxu0 0.0
        %1557 = vmatpush1.msra.mxu0 0.0
        %1558 = vmatprep.subr.mxu0 0.0
        %1559 = vmatpush1.msra.mxu0 0.0
        %1560 = vmatprep.subr.mxu0 0.0
        %1561 = vmatpush1.msra.mxu0 0.0
        %1562 = vmatprep.subr.mxu0 0.0
        %1563 = vmatpush1.msra.mxu0 0.0
        %1564 = vmatprep.subr.mxu0 0.0
        %1565 = vmatpush1.msra.mxu0 0.0
        %1566 = vmatprep.subr.mxu0 0.0
        %1567 = vmatpush1.msra.mxu0 0.0
        %1568 = vmatprep.mubr.f32.mxu0 0.0
        %1569 = vmatmul.mubr.f32.gmra.mrb[0].mxu0 %v369
        %v1570 = vpop.f32.mrb[0].mxu0
        %v1571 = vadd.f32 %v352, %v1570
        %v1572 = vpop.f32.mrb[0].mxu0
        %1573 = vdwg.mxu0
        %v1575 = vsel %vm444, %v1571, 0
        %1577 = vmatprep.subr.mxu0 0.0
        %1578 = vmatpush1.msra.mxu0 %v343
        %1579 = vmatprep.subr.mxu0 0.0
        %1580 = vmatpush1.msra.mxu0 %v344
        %1581 = vmatprep.subr.mxu0 0.0
        %1582 = vmatpush1.msra.mxu0 0.0
        %1583 = vmatprep.subr.mxu0 0.0
        %1584 = vmatpush1.msra.mxu0 0.0
        %1585 = vmatprep.subr.mxu0 0.0
        %1586 = vmatpush1.msra.mxu0 0.0
        %1587 = vmatprep.subr.mxu0 0.0
        %1588 = vmatpush1.msra.mxu0 0.0
        %1589 = vmatprep.subr.mxu0 0.0
        %1590 = vmatpush1.msra.mxu0 0.0
        %1591 = vmatprep.subr.mxu0 0.0
        %1592 = vmatpush1.msra.mxu0 0.0
        %1593 = vmatprep.subr.mxu0 0.0
        %1594 = vmatpush1.msra.mxu0 0.0
        %1595 = vmatprep.subr.mxu0 0.0
        %1596 = vmatpush1.msra.mxu0 0.0
        %1597 = vmatprep.subr.mxu0 0.0
        %1598 = vmatpush1.msra.mxu0 0.0
        %1599 = vmatprep.subr.mxu0 0.0
        %1600 = vmatpush1.msra.mxu0 0.0
        %1601 = vmatprep.subr.mxu0 0.0
        %1602 = vmatpush1.msra.mxu0 0.0
        %1603 = vmatprep.subr.mxu0 0.0
        %1604 = vmatpush1.msra.mxu0 0.0
        %1605 = vmatprep.subr.mxu0 0.0
        %1606 = vmatpush1.msra.mxu0 0.0
        %1607 = vmatprep.subr.mxu0 0.0
        %1608 = vmatpush1.msra.mxu0 0.0
        %1609 = vmatprep.subr.mxu0 0.0
        %1610 = vmatpush1.msra.mxu0 0.0
        %1611 = vmatprep.subr.mxu0 0.0
        %1612 = vmatpush1.msra.mxu0 0.0
        %1613 = vmatprep.subr.mxu0 0.0
        %1614 = vmatpush1.msra.mxu0 0.0
        %1615 = vmatprep.subr.mxu0 0.0
        %1616 = vmatpush1.msra.mxu0 0.0
        %1617 = vmatprep.subr.mxu0 0.0
        %1618 = vmatpush1.msra.mxu0 0.0
        %1619 = vmatprep.subr.mxu0 0.0
        %1620 = vmatpush1.msra.mxu0 0.0
        %1621 = vmatprep.subr.mxu0 0.0
        %1622 = vmatpush1.msra.mxu0 0.0
        %1623 = vmatprep.subr.mxu0 0.0
        %1624 = vmatpush1.msra.mxu0 0.0
        %1625 = vmatprep.subr.mxu0 0.0
        %1626 = vmatpush1.msra.mxu0 0.0
        %1627 = vmatprep.subr.mxu0 0.0
        %1628 = vmatpush1.msra.mxu0 0.0
        %1629 = vmatprep.subr.mxu0 0.0
        %1630 = vmatpush1.msra.mxu0 0.0
        %1631 = vmatprep.subr.mxu0 0.0
        %1632 = vmatpush1.msra.mxu0 0.0
        %1633 = vmatprep.subr.mxu0 0.0
        %1634 = vmatpush1.msra.mxu0 0.0
        %1635 = vmatprep.subr.mxu0 0.0
        %1636 = vmatpush1.msra.mxu0 0.0
        %1637 = vmatprep.subr.mxu0 0.0
        %1638 = vmatpush1.msra.mxu0 0.0
        %1639 = vmatprep.subr.mxu0 0.0
        %1640 = vmatpush1.msra.mxu0 0.0
        %1641 = vmatprep.mubr.f32.mxu0 0.0
        %1642 = vmatmul.mubr.f32.gmra.mrb[0].mxu0 %v1575
        %v1643 = vpop.f32.mrb[0].mxu0
        %v1644 = vadd.f32 0.0, %v1643
        %v1645 = vpop.f32.mrb[0].mxu0
        %1646 = vdwg.mxu0
        %v1649 = vunpack.c.l.s4 1966171168
        %v1650 = vunpack.c.0.s8 %v1649
        %v1651 = vlaneseq
        %v1652 = vshrl.u32 %v1651, 7
        %v1653 = vsub.s32 %v1650, %v1652
        %v1654 = vrot.slane %v1644, %v1653
        %v1655 = vcombine.high %v1654, %v1654
        %v1657 = vunpack.c.l.s4 1966171168
        %v1658 = vunpack.c.0.s8 %v1657
        %v1659 = vlaneseq
        %v1660 = vshrl.u32 %v1659, 7
        %v1661 = vsub.s32 %v1658, %v1660
        %v1662 = vrot.slane %v1654, %v1661
        %v1664 = vunpack.c.l.s4 1966171168
        %v1665 = vunpack.c.0.s8 %v1664
        %v1666 = vlaneseq
        %v1667 = vshrl.u32 %v1666, 7
        %v1668 = vsub.s32 %v1665, %v1667
        %v1669 = vrot.slane %v1655, %v1668
        %1672 = vst.msk [vmem:[%s328 + $0xc] sm:$0x1] %vm543, %v1662
        %1673 = vst.msk [vmem:[%s328 + $0x1c] sm:$0x1] %vm543, %v1669
        %1674 = vst.msk [vmem:[%s328 + $0xd] sm:$0x1] %vm543, %v1662
        %1675 = vst.msk [vmem:[%s328 + $0x1d] sm:$0x1] %vm543, %v1669
        %v1676 = vld [vmem:[%s288 + $0x7] sm:$0x1]
        %v1677 = vld [vmem:[%s288 + $0xf] sm:$0x1]
        %v1678 = vld [vmem:[%s288 + $0x17] sm:$0x1]
        %v1679 = vld [vmem:[%s288 + $0x1f] sm:$0x1]
        %v1684 = vrot.slane %v1677, 7
        %v1685 = vsel %vm359, %v1684, %v1676
        %v1686 = vrot.slane %v1678, 6
        %v1687 = vsel %vm362, %v1686, %v1685
        %v1688 = vrot.slane %v1679, 5
        %v1689 = vsel %vm365, %v1688, %v1687
        %v1690 = vsel %vm371, %v1689, 0
        %1692 = vmatprep.subr.mxu0 0.0
        %1693 = vmatpush1.msra.mxu0 %v1690
        %1694 = vmatprep.subr.mxu0 0.0
        %1695 = vmatpush1.msra.mxu0 0.0
        %1696 = vmatprep.subr.mxu0 0.0
        %1697 = vmatpush1.msra.mxu0 0.0
        %1698 = vmatprep.subr.mxu0 0.0
        %1699 = vmatpush1.msra.mxu0 0.0
        %1700 = vmatprep.subr.mxu0 0.0
        %1701 = vmatpush1.msra.mxu0 0.0
        %1702 = vmatprep.subr.mxu0 0.0
        %1703 = vmatpush1.msra.mxu0 0.0
        %1704 = vmatprep.subr.mxu0 0.0
        %1705 = vmatpush1.msra.mxu0 0.0
        %1706 = vmatprep.subr.mxu0 0.0
        %1707 = vmatpush1.msra.mxu0 0.0
        %1708 = vmatprep.subr.mxu0 0.0
        %1709 = vmatpush1.msra.mxu0 0.0
        %1710 = vmatprep.subr.mxu0 0.0
        %1711 = vmatpush1.msra.mxu0 0.0
        %1712 = vmatprep.subr.mxu0 0.0
        %1713 = vmatpush1.msra.mxu0 0.0
        %1714 = vmatprep.subr.mxu0 0.0
        %1715 = vmatpush1.msra.mxu0 0.0
        %1716 = vmatprep.subr.mxu0 0.0
        %1717 = vmatpush1.msra.mxu0 0.0
        %1718 = vmatprep.subr.mxu0 0.0
        %1719 = vmatpush1.msra.mxu0 0.0
        %1720 = vmatprep.subr.mxu0 0.0
        %1721 = vmatpush1.msra.mxu0 0.0
        %1722 = vmatprep.subr.mxu0 0.0
        %1723 = vmatpush1.msra.mxu0 0.0
        %1724 = vmatprep.subr.mxu0 0.0
        %1725 = vmatpush1.msra.mxu0 0.0
        %1726 = vmatprep.subr.mxu0 0.0
        %1727 = vmatpush1.msra.mxu0 0.0
        %1728 = vmatprep.subr.mxu0 0.0
        %1729 = vmatpush1.msra.mxu0 0.0
        %1730 = vmatprep.subr.mxu0 0.0
        %1731 = vmatpush1.msra.mxu0 0.0
        %1732 = vmatprep.subr.mxu0 0.0
        %1733 = vmatpush1.msra.mxu0 0.0
        %1734 = vmatprep.subr.mxu0 0.0
        %1735 = vmatpush1.msra.mxu0 0.0
        %1736 = vmatprep.subr.mxu0 0.0
        %1737 = vmatpush1.msra.mxu0 0.0
        %1738 = vmatprep.subr.mxu0 0.0
        %1739 = vmatpush1.msra.mxu0 0.0
        %1740 = vmatprep.subr.mxu0 0.0
        %1741 = vmatpush1.msra.mxu0 0.0
        %1742 = vmatprep.subr.mxu0 0.0
        %1743 = vmatpush1.msra.mxu0 0.0
        %1744 = vmatprep.subr.mxu0 0.0
        %1745 = vmatpush1.msra.mxu0 0.0
        %1746 = vmatprep.subr.mxu0 0.0
        %1747 = vmatpush1.msra.mxu0 0.0
        %1748 = vmatprep.subr.mxu0 0.0
        %1749 = vmatpush1.msra.mxu0 0.0
        %1750 = vmatprep.subr.mxu0 0.0
        %1751 = vmatpush1.msra.mxu0 0.0
        %1752 = vmatprep.subr.mxu0 0.0
        %1753 = vmatpush1.msra.mxu0 0.0
        %1754 = vmatprep.subr.mxu0 0.0
        %1755 = vmatpush1.msra.mxu0 0.0
        %1756 = vmatprep.mubr.f32.mxu0 0.0
        %1757 = vmatmul.mubr.f32.gmra.mrb[0].mxu0 %v369
        %v1758 = vpop.f32.mrb[0].mxu0
        %v1759 = vadd.f32 %v352, %v1758
        %v1760 = vpop.f32.mrb[0].mxu0
        %1761 = vdwg.mxu0
        %v1763 = vsel %vm444, %v1759, 0
        %1765 = vmatprep.subr.mxu0 0.0
        %1766 = vmatpush1.msra.mxu0 %v343
        %1767 = vmatprep.subr.mxu0 0.0
        %1768 = vmatpush1.msra.mxu0 %v344
        %1769 = vmatprep.subr.mxu0 0.0
        %1770 = vmatpush1.msra.mxu0 0.0
        %1771 = vmatprep.subr.mxu0 0.0
        %1772 = vmatpush1.msra.mxu0 0.0
        %1773 = vmatprep.subr.mxu0 0.0
        %1774 = vmatpush1.msra.mxu0 0.0
        %1775 = vmatprep.subr.mxu0 0.0
        %1776 = vmatpush1.msra.mxu0 0.0
        %1777 = vmatprep.subr.mxu0 0.0
        %1778 = vmatpush1.msra.mxu0 0.0
        %1779 = vmatprep.subr.mxu0 0.0
        %1780 = vmatpush1.msra.mxu0 0.0
        %1781 = vmatprep.subr.mxu0 0.0
        %1782 = vmatpush1.msra.mxu0 0.0
        %1783 = vmatprep.subr.mxu0 0.0
        %1784 = vmatpush1.msra.mxu0 0.0
        %1785 = vmatprep.subr.mxu0 0.0
        %1786 = vmatpush1.msra.mxu0 0.0
        %1787 = vmatprep.subr.mxu0 0.0
        %1788 = vmatpush1.msra.mxu0 0.0
        %1789 = vmatprep.subr.mxu0 0.0
        %1790 = vmatpush1.msra.mxu0 0.0
        %1791 = vmatprep.subr.mxu0 0.0
        %1792 = vmatpush1.msra.mxu0 0.0
        %1793 = vmatprep.subr.mxu0 0.0
        %1794 = vmatpush1.msra.mxu0 0.0
        %1795 = vmatprep.subr.mxu0 0.0
        %1796 = vmatpush1.msra.mxu0 0.0
        %1797 = vmatprep.subr.mxu0 0.0
        %1798 = vmatpush1.msra.mxu0 0.0
        %1799 = vmatprep.subr.mxu0 0.0
        %1800 = vmatpush1.msra.mxu0 0.0
        %1801 = vmatprep.subr.mxu0 0.0
        %1802 = vmatpush1.msra.mxu0 0.0
        %1803 = vmatprep.subr.mxu0 0.0
        %1804 = vmatpush1.msra.mxu0 0.0
        %1805 = vmatprep.subr.mxu0 0.0
        %1806 = vmatpush1.msra.mxu0 0.0
        %1807 = vmatprep.subr.mxu0 0.0
        %1808 = vmatpush1.msra.mxu0 0.0
        %1809 = vmatprep.subr.mxu0 0.0
        %1810 = vmatpush1.msra.mxu0 0.0
        %1811 = vmatprep.subr.mxu0 0.0
        %1812 = vmatpush1.msra.mxu0 0.0
        %1813 = vmatprep.subr.mxu0 0.0
        %1814 = vmatpush1.msra.mxu0 0.0
        %1815 = vmatprep.subr.mxu0 0.0
        %1816 = vmatpush1.msra.mxu0 0.0
        %1817 = vmatprep.subr.mxu0 0.0
        %1818 = vmatpush1.msra.mxu0 0.0
        %1819 = vmatprep.subr.mxu0 0.0
        %1820 = vmatpush1.msra.mxu0 0.0
        %1821 = vmatprep.subr.mxu0 0.0
        %1822 = vmatpush1.msra.mxu0 0.0
        %1823 = vmatprep.subr.mxu0 0.0
        %1824 = vmatpush1.msra.mxu0 0.0
        %1825 = vmatprep.subr.mxu0 0.0
        %1826 = vmatpush1.msra.mxu0 0.0
        %1827 = vmatprep.subr.mxu0 0.0
        %1828 = vmatpush1.msra.mxu0 0.0
        %1829 = vmatprep.mubr.f32.mxu0 0.0
        %1830 = vmatmul.mubr.f32.gmra.mrb[0].mxu0 %v1763
        %v1831 = vpop.f32.mrb[0].mxu0
        %v1832 = vadd.f32 0.0, %v1831
        %v1833 = vpop.f32.mrb[0].mxu0
        %1834 = vdwg.mxu0
        %v1837 = vunpack.c.l.s4 1966171168
        %v1838 = vunpack.c.0.s8 %v1837
        %v1839 = vlaneseq
        %v1840 = vshrl.u32 %v1839, 7
        %v1841 = vsub.s32 %v1838, %v1840
        %v1842 = vrot.slane %v1832, %v1841
        %v1843 = vcombine.high %v1842, %v1842
        %v1845 = vunpack.c.l.s4 1966171168
        %v1846 = vunpack.c.0.s8 %v1845
        %v1847 = vlaneseq
        %v1848 = vshrl.u32 %v1847, 7
        %v1849 = vsub.s32 %v1846, %v1848
        %v1850 = vrot.slane %v1842, %v1849
        %v1852 = vunpack.c.l.s4 1966171168
        %v1853 = vunpack.c.0.s8 %v1852
        %v1854 = vlaneseq
        %v1855 = vshrl.u32 %v1854, 7
        %v1856 = vsub.s32 %v1853, %v1855
        %v1857 = vrot.slane %v1843, %v1856
        %1860 = vst.msk [vmem:[%s328 + $0xe] sm:$0x1] %vm543, %v1850
        %1861 = vst.msk [vmem:[%s328 + $0x1e] sm:$0x1] %vm543, %v1857
        %1862 = vst.msk [vmem:[%s328 + $0xf] sm:$0x1] %vm543, %v1850
        %1863 = vst.msk [vmem:[%s328 + $0x1f] sm:$0x1] %vm543, %v1857
        %s1864 = sand.u32 %s166, 1
        %s1865 = scalar_lea.sflag [#allocation4], %s1864
        %s1866 = sand.u32 %s166, 1
        %s1867 = smul.addr %s1866, 64
        %s1868 = scalar_lea.vmem [#allocation7], %s1867
        // Predicated region
        $region49: #{upsample_forward.1} parent=39 // pred_check
          %p1869 = pneg %p176
        $region50: #{upsample_forward.1} parent=39 // pred_check_branch
          %1871 = sbr.rel (%p1869) target = $region52
        $region51: #{upsample_forward.1} parent=39 // pred_region
          #allocation11 [shape = 'u32[6]{0}', space=smem, size = 0x18, scoped, tag = 'DMA stride descriptor']
          %s1872 = smul.u32 2, %s30
          %s1874 = ssub.s32 1024, 1024
          %1875 = vsyncadd %s1865, %s1874
          %s1876 = smul.addr %s29, 16
          %s1877 = sadd.s32 %s1872, %s1876
          %s1878 = smul.addr %s1877, 128
          %s1879 = scalar_lea.hbm %s5, %s1878
          %s1881 = sshll.u32 1, 14
          %s1882 = sxor.u32 4294967295, %s1881
          %s1885 = sshll.u32 7, 18
          %s1886 = sxor.u32 4294967295, %s1885
          %s1887 = sand.u32 0, %s1886
          %s1889 = sor.u32 %s1887, 0
          %s1891 = sshll.u32 3, 24
          %s1892 = sxor.u32 4294967295, %s1891
          %s1893 = sand.u32 %s1889, %s1892
          %s1895 = sor.u32 %s1893, 0
          %s1896 = sshll.u32 %s1868, 4
          %s1897 = int_to_ptr.vmem [resolvable:$true] %s1896
          %1903 = sst [smem:[#allocation11]] 256
          %s1904 = scalar_lea.smem [#allocation11], 1
          %1905 = sst [smem:[%s1904]] 512
          %s1906 = scalar_lea.smem [#allocation11], 2
          %1907 = sst [smem:[%s1906]] 2
          %s1908 = scalar_lea.smem [#allocation11], 3
          %1909 = sst [smem:[%s1908]] 128
          %s1910 = scalar_lea.smem [#allocation11], 4
          %1911 = sst [smem:[%s1910]] 128
          %s1912 = scalar_lea.smem [#allocation11], 5
          %1913 = sst [smem:[%s1912]] 8
          %1915 = dma.general %s1897, 1024, %s1879, %s1865, [#allocation10], [#allocation11], %s1895, 0
        $region52: #{upsample_forward.1} parent=39 // pred_fallthru
          _
      $region40: #{upsample_forward.1} parent=5 // pred_fallthru
        _
      %p1916 = scmp.le.s32.totalorder 2, %s20
      // Predicated region
      $region53: #{upsample_forward.1} parent=5 // pred_check
        %p1917 = pneg %p1916
      $region54: #{upsample_forward.1} parent=5 // pred_check_branch
        %1919 = sbr.rel (%p1917) target = $region56
      $region55: #{upsample_forward.1} parent=5 // pred_region
        %s1920 = ssub.s32 %s20, 2
        // Predicated region
        $region57: #{upsample_forward.1} parent=55 // pred_check
          %p1921 = pneg %p182
        $region58: #{upsample_forward.1} parent=55 // pred_check_branch
          %1923 = sbr.rel (%p1921) target = $region60
        $region59: #{upsample_forward.1} parent=55 // pred_region
          %s1924 = sand.u32 %s167, 1
          %s1925 = scalar_lea.sflag [#allocation4], %s1924
          %s1926 = sand.u32 %s167, 1
          %s1927 = smul.addr %s1926, 64
          %s1928 = scalar_lea.vmem [#allocation7], %s1927
          %1929 = dma.done %s1925, 1024
        $region60: #{upsample_forward.1} parent=55 // pred_fallthru
          _
      $region56: #{upsample_forward.1} parent=5 // pred_fallthru
        _
    $region6: #{upsample_forward.1} parent=1 // loop_footer
      %s24 = sadd.s32 1, %s20
    $region7: #{upsample_forward.1} parent=1 // loop_footer_branch
      %19 = sbr.rel target = $region3
    $region8: #{upsample_forward.1} parent=1 // loop_exit
      _
    %1930 = vsyncpa [#allocation3], 1
    %s1931 = scalar_lea.sflag [#allocation3], 1
    %1932 = vsyncpa %s1931, 1
    %1933 = vsyncpa [#allocation6], 1
    %s1934 = scalar_lea.sflag [#allocation6], 1
    %1935 = vsyncpa %s1934, 1
    %1936 = vsyncpa [#allocation4], 1
    %s1937 = scalar_lea.sflag [#allocation4], 1
    %1938 = vsyncpa %s1937, 1

</llo_original>
